<compile_context>
chip_gen: v7x
topology: tpu7x:2x2x1
jax: 0.10.0
libtpu: 0.0.40
codegen_flags: <defaults>
</compile_context>

<pallas_src>
import functools

import jax
import jax.numpy as jnp
from jax.experimental import pallas as pl
from jax.experimental.pallas import tpu as pltpu


def _round_up(x, m):
    return (x + m - 1) // m * m


def _pick_tile(n128, cap=512, single_cap=640):
    """Pick a 128-multiple tile for an axis whose 128-rounded length is n128.

    Use a single tile when it fits under `single_cap` (zero padding, one kv
    pass).  Otherwise pick the largest tile <= cap whose padding overhead is
    small, falling back to the tile minimizing the padded extent.  Keeps
    wasted (padded) MXU/VPU work low while keeping tiles big enough to
    amortize per-step overhead and minimize x_kv re-read passes (~N/tile_q).
    """
    if n128 <= single_cap:
        return n128
    slack = max(128, n128 // 8)
    best = None
    for t in range(cap, 0, -128):
        padded = -(-n128 // t) * t
        if padded - n128 <= slack:
            return t
        if best is None or padded < best[0]:
            best = (padded, t)
    return best[1]


def _default_exp_dtype():
    """bf16 softmax numerator on chips with bf16 VPU/EUP (v6e/v7x), f32 otherwise."""
    try:
        kind = jax.devices()[0].device_kind.lower()
    except Exception:
        return jnp.bfloat16
    for tag in ("v2", "v3", "v4", "v5"):
        if tag in kind:
            return jnp.float32
    return jnp.bfloat16


def _flash_cross_attn_kernel(
        xq_ref, xkv_ref,
        wq_ref, bq_ref, wkv_ref, bkv_ref, wo_ref, bo_ref,
        out_ref,
        q_scr, acc_scr, m_scr, l_scr,
        *, num_heads, head_dim, n_actual, tile_kv, mask_kv, mxu_dtype, exp_dtype):
    C = num_heads * head_dim
    ki = pl.program_id(2)
    nk = pl.num_programs(2)

    @pl.when(ki == 0)
    def _init():
        # Q projection for this q-tile (softmax scale folded into Wq / bq).
        q = jnp.dot(wq_ref[...], xq_ref[0],
                    preferred_element_type=jnp.float32) + bq_ref[...]   # (C, tq) f32
        q_scr[...] = q.reshape(num_heads, head_dim, -1).astype(mxu_dtype)
        acc_scr[...] = jnp.zeros_like(acc_scr)
        m_scr[...] = jnp.full_like(m_scr, -jnp.inf)
        l_scr[...] = jnp.zeros_like(l_scr)

    # Fused K/V projection for this kv-tile (single MXU call).  At small C the
    # per-q-tile recompute is cheaper than an HBM round trip of projected K/V.
    # TODO(synk): for large C, cache projected K/V for the whole row in a
    # persistent VMEM scratch (filled on the first q-tile) instead.
    kv = jnp.dot(wkv_ref[...], xkv_ref[0],
                 preferred_element_type=jnp.float32) + bkv_ref[...]     # (2C, tkv) f32
    k = kv[:C].reshape(num_heads, head_dim, -1).astype(mxu_dtype)       # (h, hd, tkv)
    v = kv[C:].reshape(num_heads, head_dim, -1).astype(mxu_dtype)       # (h, hd, tkv)

    # Scores kept transposed (heads, tkv, tq): softmax reduction runs over the
    # sublane axis and every tensor keeps tq on the lane axis (lane-dense).
    q = q_scr[...]                                                      # (h, hd, tq)
    s = jax.lax.dot_general(
        k, q, dimension_numbers=(((1,), (1,)), ((0,), (0,))),
        preferred_element_type=jnp.float32)                             # (h, tkv, tq)

    if mask_kv:
        # Additive bias on the kv (sublane) axis: one broadcast add over s
        # instead of a full-tile iota/compare/select per step.  It is all-zero
        # on fully valid tiles (padding only ever lives in the last kv tile,
        # and padding < tile_kv so a tile is never fully masked).
        j = jax.lax.broadcasted_iota(jnp.int32, (1, tile_kv, 1), 1) + ki * tile_kv
        s = s + jnp.where(j < n_actual, 0.0, -1e30).astype(jnp.float32)

    m_prev = m_scr[...]                                                 # (h, 1, tq)
    m_new = jnp.maximum(m_prev, jnp.max(s, axis=1, keepdims=True))
    alpha = jnp.exp(m_prev - m_new)                                     # (h, 1, tq)
    p = jnp.exp((s - m_new).astype(exp_dtype))     # bf16 EUP/VPU on v6e/v7x, f32 on v5e
    l_scr[...] = alpha * l_scr[...] + jnp.sum(p, axis=1, keepdims=True,
                                              dtype=jnp.float32)
    p_mm = p if p.dtype == mxu_dtype else p.astype(mxu_dtype)
    pv = jax.lax.dot_general(
        v, p_mm, dimension_numbers=(((2,), (1,)), ((0,), (0,))),
        preferred_element_type=jnp.float32)                             # (h, hd, tq)
    acc_scr[...] = alpha * acc_scr[...] + pv
    m_scr[...] = m_new

    @pl.when(ki == nk - 1)
    def _finalize():
        inv_l = pl.reciprocal(l_scr[...], approx=False)   # exact; once per q-tile
        attn = (acc_scr[...] * inv_l).reshape(C, -1)                    # (C, tq) f32
        out = jnp.dot(wo_ref[...], attn.astype(mxu_dtype),
                      preferred_element_type=jnp.float32) + bo_ref[...]
        out_ref[0] = out.astype(out_ref.dtype)


def cross_attention_3d(x_q, x_kv, params, num_heads, *,
                       mxu_dtype=jnp.bfloat16, exp_dtype=None):
    """x_q, x_kv: (B, C, D, H, W) float32.  Returns (B, C, D, H, W)."""
    B, C, D, H, W = x_q.shape
    N = D * H * W
    head_dim = C // num_heads
    scale = float(head_dim) ** (-0.5)
    if exp_dtype is None:
        exp_dtype = _default_exp_dtype()

    # Tile selection: lane-dense, padding-minimizing, sized for v7x VMEM.
    n128 = _round_up(N, 128)
    tile_q = _pick_tile(n128)
    tile_kv = _pick_tile(n128)
    nq_pad = _round_up(N, tile_q)
    nkv_pad = _round_up(N, tile_kv)

    # Channels-major view (free reshape, no transpose): N is the lane axis.
    # Activations streamed in bf16 (cast fuses with the pad -> single HBM
    # pass); in-kernel projections still accumulate in f32.
    xq = x_q.reshape(B, C, N).astype(mxu_dtype)
    xkv = x_kv.reshape(B, C, N).astype(mxu_dtype)
    if nq_pad != N:
        xq = jnp.pad(xq, ((0, 0), (0, 0), (0, nq_pad - N)))
    if nkv_pad != N:
        xkv = jnp.pad(xkv, ((0, 0), (0, 0), (0, nkv_pad - N)))

    # PyTorch Linear weights are (out, in); channels-major uses them directly
    # (y = W @ x + b).  Fold the softmax scale into Wq/bq; fuse Wk|Wv so the KV
    # projection is one matmul.
    wq = (params["wq"] * scale).astype(mxu_dtype)
    wkv = jnp.concatenate([params["wk"], params["wv"]], axis=0).astype(mxu_dtype)
    wo = params["wo"].astype(mxu_dtype)
    bq = (params["bq"] * scale).reshape(C, 1).astype(jnp.float32)
    bkv = jnp.concatenate([params["bk"], params["bv"]]).reshape(2 * C, 1).astype(jnp.float32)
    bo = params["bo"].reshape(C, 1).astype(jnp.float32)

    grid = (B, nq_pad // tile_q, nkv_pad // tile_kv)

    kernel = functools.partial(
        _flash_cross_attn_kernel,
        num_heads=num_heads, head_dim=head_dim, n_actual=N,
        tile_kv=tile_kv, mask_kv=(nkv_pad != N),
        mxu_dtype=mxu_dtype, exp_dtype=exp_dtype)

    q_spec = pl.BlockSpec((1, C, tile_q), lambda b, qi, ki: (b, 0, qi))
    kv_spec = pl.BlockSpec((1, C, tile_kv), lambda b, qi, ki: (b, 0, ki))

    # Weights/biases: constant block index -> never re-DMA'd across the grid.
    def const(shape):
        return pl.BlockSpec(shape, lambda b, qi, ki: (0,) * len(shape))

    # Right-size the scoped VMEM limit (v7x has only 64 MiB physical VMEM):
    # double-buffered blocks + resident weights + scratch + ~3 live
    # score-sized f32 temporaries + 16 MiB headroom, clamped to [32, 48] MiB.
    s_bytes = num_heads * tile_kv * tile_q * 4
    blocks = 2 * (C * tile_q * 2 + C * tile_kv * 2 + C * tile_q * 4)
    weights = 2 * (4 * C * C * 2 + 4 * C * 4)
    scratch = num_heads * head_dim * tile_q * 6 + 2 * num_heads * tile_q * 4
    vmem_limit = int(min(48 << 20,
                         max(32 << 20,
                             blocks + weights + scratch + 3 * s_bytes + (16 << 20))))

    out_pad = pl.pallas_call(
        kernel,
        out_shape=jax.ShapeDtypeStruct((B, C, nq_pad), x_q.dtype),
        grid_spec=pltpu.PrefetchScalarGridSpec(
            num_scalar_prefetch=0,
            grid=grid,
            in_specs=[q_spec, kv_spec,
                      const((C, C)), const((C, 1)),
                      const((2 * C, C)), const((2 * C, 1)),
                      const((C, C)), const((C, 1))],
            out_specs=q_spec,
            scratch_shapes=[
                pltpu.VMEM((num_heads, head_dim, tile_q), mxu_dtype),    # q
                pltpu.VMEM((num_heads, head_dim, tile_q), jnp.float32),  # acc
                pltpu.VMEM((num_heads, 1, tile_q), jnp.float32),         # running max
                pltpu.VMEM((num_heads, 1, tile_q), jnp.float32),         # running sum
            ]),
        compiler_params=pltpu.CompilerParams(
            # B and the q-tile axis are independent; the kv axis carries the
            # online-softmax state and must stay last / "arbitrary".
            # TODO(synk): on v7x verify both TensorCores get work at B=1..2;
            # if not, mark the q-tile axis pltpu.CORE_PARALLEL.
            dimension_semantics=("parallel", "parallel", "arbitrary"),
            vmem_limit_bytes=vmem_limit),
    )(xq, xkv, wq, bq, wkv, bkv, wo, bo)

    out = out_pad[:, :, :N] if nq_pad != N else out_pad
    return out.reshape(B, C, D, H, W)


def _reference(x_q, x_kv, params, num_heads):
    """Pure-JAX f32 reference mirroring the PyTorch forward."""
    B, C, D, H, W = x_q.shape
    N = D * H * W
    hd = C // num_heads
    scale = float(hd) ** (-0.5)
    xq = x_q.reshape(B, C, N).transpose(0, 2, 1)
    xkv = x_kv.reshape(B, C, N).transpose(0, 2, 1)
    q = xq @ params["wq"].T + params["bq"]
    k = xkv @ params["wk"].T + params["bk"]
    v = xkv @ params["wv"].T + params["bv"]
    q = q.reshape(B, N, num_heads, hd).transpose(0, 2, 1, 3)
    k = k.reshape(B, N, num_heads, hd).transpose(0, 2, 1, 3)
    v = v.reshape(B, N, num_heads, hd).transpose(0, 2, 1, 3)
    s = jnp.einsum("bhqd,bhkd->bhqk", q, k) * scale
    p = jax.nn.softmax(s, axis=-1)
    o = jnp.einsum("bhqk,bhkd->bhqd", p, v)
    o = o.transpose(0, 2, 1, 3).reshape(B, N, C)
    o = o @ params["wo"].T + params["bo"]
    return o.transpose(0, 2, 1).reshape(B, C, D, H, W)


if __name__ == "__main__":
    num_heads = 4

    def make_params(key, C):
        keys = jax.random.split(key, 8)
        names = ["wq", "bq", "wk", "bk", "wv", "bv", "wo", "bo"]
        return {n: jax.random.normal(keys[i], (C, C) if n.startswith("w") else (C,),
                                     jnp.float32) * 0.05
                for i, n in enumerate(names)}

    key = jax.random.PRNGKey(0)
    k_par, k_q1, k_kv1, k_q2, k_kv2, k_q3, k_kv3 = jax.random.split(key, 7)

    # Case 1: tiny volume (N = 64 -> single padded 128-lane tile, kv mask).
    B, C, D, H, W = 2, 32, 4, 4, 4
    params = make_params(k_par, C)
    x_q = jax.random.normal(k_q1, (B, C, D, H, W), jnp.float32)
    x_kv = jax.random.normal(k_kv1, (B, C, D, H, W), jnp.float32)
    out = jax.block_until_ready(cross_attention_3d(x_q, x_kv, params, num_heads))
    ref = _reference(x_q, x_kv, params, num_heads)
    assert out.shape == ref.shape
    assert jnp.allclose(out, ref, atol=2e-2, rtol=2e-2), "case1 mismatch vs reference"

    # Case 2: N = 600 -> single 640-lane tile (no padded-tile waste) + kv mask.
    B2, C2, D2, H2, W2 = 1, 32, 6, 10, 10
    params2 = make_params(k_par, C2)
    x_q2 = jax.random.normal(k_q2, (B2, C2, D2, H2, W2), jnp.float32)
    x_kv2 = jax.random.normal(k_kv2, (B2, C2, D2, H2, W2), jnp.float32)
    out2 = jax.block_until_ready(cross_attention_3d(x_q2, x_kv2, params2, num_heads))
    ref2 = _reference(x_q2, x_kv2, params2, num_heads)
    assert jnp.allclose(out2, ref2, atol=2e-2, rtol=2e-2), "case2 mismatch vs reference"

    # Case 3: N = 1100 -> 3 q-tiles x 3 kv-tiles of 384: exercises the online
    # softmax accumulation across kv steps, multi-q-tile output, and the mask.
    B3, C3, D3, H3, W3 = 1, 32, 11, 10, 10
    params3 = make_params(k_par, C3)
    x_q3 = jax.random.normal(k_q3, (B3, C3, D3, H3, W3), jnp.float32)
    x_kv3 = jax.random.normal(k_kv3, (B3, C3, D3, H3, W3), jnp.float32)
    out3 = jax.block_until_ready(cross_attention_3d(x_q3, x_kv3, params3, num_heads))
    ref3 = _reference(x_q3, x_kv3, params3, num_heads)
    assert jnp.allclose(out3, ref3, atol=2e-2, rtol=2e-2), "case3 mismatch vs reference"

    print("KERNEL_OK")
</pallas_src>

<mosaic_0001>
module attributes {stable_mosaic.version = 11 : i64} {
  func.func @_flash_cross_attn_kernel(%arg0: i32, %arg1: i32, %arg2: i32, %arg3: memref<1x32x128xbf16, #tpu.memory_space<vmem>>, %arg4: memref<1x32x128xbf16, #tpu.memory_space<vmem>>, %arg5: memref<32x32xbf16, #tpu.memory_space<vmem>>, %arg6: memref<32x1xf32, #tpu.memory_space<vmem>>, %arg7: memref<64x32xbf16, #tpu.memory_space<vmem>>, %arg8: memref<64x1xf32, #tpu.memory_space<vmem>>, %arg9: memref<32x32xbf16, #tpu.memory_space<vmem>>, %arg10: memref<32x1xf32, #tpu.memory_space<vmem>>, %arg11: memref<1x32x128xf32, #tpu.memory_space<vmem>>, %arg12: memref<4x8x128xbf16, #tpu.memory_space<vmem>>, %arg13: memref<4x8x128xf32, #tpu.memory_space<vmem>>, %arg14: memref<4x1x128xf32, #tpu.memory_space<vmem>>, %arg15: memref<4x1x128xf32, #tpu.memory_space<vmem>>) attributes {dimension_semantics = [#tpu.dimension_semantics<parallel>, #tpu.dimension_semantics<parallel>, #tpu.dimension_semantics<arbitrary>], iteration_bounds = array<i64: 2, 1, 1>, scalar_prefetch = 0 : i64, scratch_operands = 4 : i64, tpu.core_type = #tpu.core_type<tc>, window_params = [{transform_indices = @transform_0, window_bounds = array<i64: 1, 32, 128>}, {transform_indices = @transform_1, window_bounds = array<i64: 1, 32, 128>}, {pipeline_mode = #tpu.pipeline_mode<synchronous>, transform_indices = @transform_2, window_bounds = array<i64: 32, 32>}, {pipeline_mode = #tpu.pipeline_mode<synchronous>, transform_indices = @transform_3, window_bounds = array<i64: 32, 1>}, {pipeline_mode = #tpu.pipeline_mode<synchronous>, transform_indices = @transform_4, window_bounds = array<i64: 64, 32>}, {pipeline_mode = #tpu.pipeline_mode<synchronous>, transform_indices = @transform_5, window_bounds = array<i64: 64, 1>}, {pipeline_mode = #tpu.pipeline_mode<synchronous>, transform_indices = @transform_6, window_bounds = array<i64: 32, 32>}, {pipeline_mode = #tpu.pipeline_mode<synchronous>, transform_indices = @transform_7, window_bounds = array<i64: 32, 1>}, {transform_indices = @transform_8, window_bounds = array<i64: 1, 32, 128>}]} {
    %c0_i32 = arith.constant 0 : i32
    %0 = arith.cmpi eq, %arg2, %c0_i32 : i32
    %1 = arith.extui %0 : i1 to i32
    %c0_i32_0 = arith.constant 0 : i32
    %2 = arith.cmpi ne, %1, %c0_i32_0 : i32
    scf.if %2 {
      %c0_36 = arith.constant 0 : index
      %c0_37 = arith.constant 0 : index
      %56 = vector.load %arg5[%c0_36, %c0_37] : memref<32x32xbf16, #tpu.memory_space<vmem>>, vector<32x32xbf16>
      %c0_38 = arith.constant 0 : index
      %c0_39 = arith.constant 0 : index
      %c0_40 = arith.constant 0 : index
      %57 = vector.load %arg3[%c0_38, %c0_39, %c0_40] : memref<1x32x128xbf16, #tpu.memory_space<vmem>>, vector<1x32x128xbf16>
      %58 = vector.shape_cast %57 : vector<1x32x128xbf16> to vector<32x128xbf16>
      %cst_41 = arith.constant dense<0.000000e+00> : vector<32x128xf32>
      %59 = tpu.matmul %56, %58, %cst_41 {dimension_numbers = #tpu.dot_dimension_numbers<[1], [0], [0], [1], [0, 0, 1, 1], [], []>} : vector<32x32xbf16>, vector<32x128xbf16>, vector<32x128xf32> -> vector<32x128xf32>
      %c0_42 = arith.constant 0 : index
      %c0_43 = arith.constant 0 : index
      %60 = vector.load %arg6[%c0_42, %c0_43] : memref<32x1xf32, #tpu.memory_space<vmem>>, vector<32x1xf32>
      %61 = vector.broadcast %60 : vector<32x1xf32> to vector<32x128xf32>
      %62 = arith.addf %59, %61 : vector<32x128xf32>
      %63 = vector.shape_cast %62 : vector<32x128xf32> to vector<4x8x128xf32>
      %64 = arith.truncf %63 : vector<4x8x128xf32> to vector<4x8x128xbf16>
      %c0_44 = arith.constant 0 : index
      %c0_45 = arith.constant 0 : index
      %c0_46 = arith.constant 0 : index
      %65 = vector.load %arg12[%c0_44, %c0_45, %c0_46] : memref<4x8x128xbf16, #tpu.memory_space<vmem>>, vector<4x8x128xbf16>
      tpu.vector_store %arg12[%c0_44, %c0_45, %c0_46], %64 {strides = array<i32>} : memref<4x8x128xbf16, #tpu.memory_space<vmem>>, vector<4x8x128xbf16>,
      %cst_47 = arith.constant 0.000000e+00 : f32
      %66 = vector.broadcast %cst_47 : f32 to vector<4x8x128xf32>
      %c0_48 = arith.constant 0 : index
      %c0_49 = arith.constant 0 : index
      %c0_50 = arith.constant 0 : index
      %67 = vector.load %arg13[%c0_48, %c0_49, %c0_50] : memref<4x8x128xf32, #tpu.memory_space<vmem>>, vector<4x8x128xf32>
      tpu.vector_store %arg13[%c0_48, %c0_49, %c0_50], %66 {strides = array<i32>} : memref<4x8x128xf32, #tpu.memory_space<vmem>>, vector<4x8x128xf32>,
      %cst_51 = arith.constant 0xFF800000 : f32
      %68 = vector.broadcast %cst_51 : f32 to vector<4x1x128xf32>
      %c0_52 = arith.constant 0 : index
      %c0_53 = arith.constant 0 : index
      %c0_54 = arith.constant 0 : index
      %69 = vector.load %arg14[%c0_52, %c0_53, %c0_54] : memref<4x1x128xf32, #tpu.memory_space<vmem>>, vector<4x1x128xf32>
      tpu.vector_store %arg14[%c0_52, %c0_53, %c0_54], %68 {strides = array<i32>} : memref<4x1x128xf32, #tpu.memory_space<vmem>>, vector<4x1x128xf32>,
      %cst_55 = arith.constant 0.000000e+00 : f32
      %70 = vector.broadcast %cst_55 : f32 to vector<4x1x128xf32>
      %c0_56 = arith.constant 0 : index
      %c0_57 = arith.constant 0 : index
      %c0_58 = arith.constant 0 : index
      %71 = vector.load %arg15[%c0_56, %c0_57, %c0_58] : memref<4x1x128xf32, #tpu.memory_space<vmem>>, vector<4x1x128xf32>
      tpu.vector_store %arg15[%c0_56, %c0_57, %c0_58], %70 {strides = array<i32>} : memref<4x1x128xf32, #tpu.memory_space<vmem>>, vector<4x1x128xf32>,
    } else {
    }
    %c0 = arith.constant 0 : index
    %c0_1 = arith.constant 0 : index
    %3 = vector.load %arg7[%c0, %c0_1] : memref<64x32xbf16, #tpu.memory_space<vmem>>, vector<64x32xbf16>
    %c0_2 = arith.constant 0 : index
    %c0_3 = arith.constant 0 : index
    %c0_4 = arith.constant 0 : index
    %4 = vector.load %arg4[%c0_2, %c0_3, %c0_4] : memref<1x32x128xbf16, #tpu.memory_space<vmem>>, vector<1x32x128xbf16>
    %5 = vector.shape_cast %4 : vector<1x32x128xbf16> to vector<32x128xbf16>
    %cst = arith.constant dense<0.000000e+00> : vector<64x128xf32>
    %6 = tpu.matmul %3, %5, %cst {dimension_numbers = #tpu.dot_dimension_numbers<[1], [0], [0], [1], [0, 0, 1, 1], [], []>} : vector<64x32xbf16>, vector<32x128xbf16>, vector<64x128xf32> -> vector<64x128xf32>
    %c0_5 = arith.constant 0 : index
    %c0_6 = arith.constant 0 : index
    %7 = vector.load %arg8[%c0_5, %c0_6] : memref<64x1xf32, #tpu.memory_space<vmem>>, vector<64x1xf32>
    %8 = vector.broadcast %7 : vector<64x1xf32> to vector<64x128xf32>
    %9 = arith.addf %6, %8 : vector<64x128xf32>
    %10 = vector.extract_strided_slice %9 {offsets = [0, 0], sizes = [32, 128], strides = [1, 1]} : vector<64x128xf32> to vector<32x128xf32>
    %11 = vector.shape_cast %10 : vector<32x128xf32> to vector<4x8x128xf32>
    %12 = arith.truncf %11 : vector<4x8x128xf32> to vector<4x8x128xbf16>
    %13 = vector.extract_strided_slice %9 {offsets = [32, 0], sizes = [32, 128], strides = [1, 1]} : vector<64x128xf32> to vector<32x128xf32>
    %14 = vector.shape_cast %13 : vector<32x128xf32> to vector<4x8x128xf32>
    %15 = arith.truncf %14 : vector<4x8x128xf32> to vector<4x8x128xbf16>
    %c0_7 = arith.constant 0 : index
    %c0_8 = arith.constant 0 : index
    %c0_9 = arith.constant 0 : index
    %16 = vector.load %arg12[%c0_7, %c0_8, %c0_9] : memref<4x8x128xbf16, #tpu.memory_space<vmem>>, vector<4x8x128xbf16>
    %cst_10 = arith.constant dense<0.000000e+00> : vector<4x128x128xf32>
    %17 = tpu.matmul %12, %16, %cst_10 {dimension_numbers = #tpu.dot_dimension_numbers<[1], [1], [2], [2], [0, 0, 0, 2, 1, 2], [0], [0]>} : vector<4x8x128xbf16>, vector<4x8x128xbf16>, vector<4x128x128xf32> -> vector<4x128x128xf32>
    %18 = tpu.iota {dimensions = array<i32: 1>} : vector<1x128x1xi32>
    %c128_i32 = arith.constant 128 : i32
    %19 = arith.muli %arg2, %c128_i32 : i32
    %20 = vector.broadcast %19 : i32 to vector<1x128x1xi32>
    %21 = arith.addi %18, %20 : vector<1x128x1xi32>
    %c64_i32 = arith.constant 64 : i32
    %22 = vector.broadcast %c64_i32 : i32 to vector<1x128x1xi32>
    %23 = arith.cmpi slt, %21, %22 : vector<1x128x1xi32>
    %cst_11 = arith.constant 0.000000e+00 : f32
    %cst_12 = arith.constant -1.000000e+30 : f32
    %24 = vector.broadcast %cst_11 : f32 to vector<1x128x1xf32>
    %25 = vector.broadcast %cst_12 : f32 to vector<1x128x1xf32>
    %26 = arith.select %23, %24, %25 : vector<1x128x1xi1>, vector<1x128x1xf32>
    %27 = vector.broadcast %26 : vector<1x128x1xf32> to vector<4x128x128xf32>
    %28 = arith.addf %17, %27 : vector<4x128x128xf32>
    %c0_13 = arith.constant 0 : index
    %c0_14 = arith.constant 0 : index
    %c0_15 = arith.constant 0 : index
    %29 = vector.load %arg14[%c0_13, %c0_14, %c0_15] : memref<4x1x128xf32, #tpu.memory_space<vmem>>, vector<4x1x128xf32>
    %cst_16 = arith.constant dense<0xFF800000> : vector<4x128xf32>
    %30 = vector.multi_reduction <maximumf>, %28, %cst_16 [1] : vector<4x128x128xf32> to vector<4x128xf32>
    %31 = vector.shape_cast %30 : vector<4x128xf32> to vector<4x1x128xf32>
    %32 = arith.maximumf %29, %31 : vector<4x1x128xf32>
    %33 = arith.subf %29, %32 : vector<4x1x128xf32>
    %34 = math.exp %33 : vector<4x1x128xf32>
    %35 = vector.broadcast %32 : vector<4x1x128xf32> to vector<4x128x128xf32>
    %36 = arith.subf %28, %35 : vector<4x128x128xf32>
    %37 = arith.truncf %36 : vector<4x128x128xf32> to vector<4x128x128xbf16>
    %38 = math.exp %37 : vector<4x128x128xbf16>
    %c0_17 = arith.constant 0 : index
    %c0_18 = arith.constant 0 : index
    %c0_19 = arith.constant 0 : index
    %39 = vector.load %arg15[%c0_17, %c0_18, %c0_19] : memref<4x1x128xf32, #tpu.memory_space<vmem>>, vector<4x1x128xf32>
    %40 = arith.mulf %34, %39 : vector<4x1x128xf32>
    %41 = arith.extf %38 : vector<4x128x128xbf16> to vector<4x128x128xf32>
    %cst_20 = arith.constant dense<0.000000e+00> : vector<4x128xf32>
    %42 = vector.multi_reduction <add>, %41, %cst_20 [1] : vector<4x128x128xf32> to vector<4x128xf32>
    %43 = vector.shape_cast %42 : vector<4x128xf32> to vector<4x1x128xf32>
    %44 = arith.addf %40, %43 : vector<4x1x128xf32>
    %c0_21 = arith.constant 0 : index
    %c0_22 = arith.constant 0 : index
    %c0_23 = arith.constant 0 : index
    %45 = vector.load %arg15[%c0_21, %c0_22, %c0_23] : memref<4x1x128xf32, #tpu.memory_space<vmem>>, vector<4x1x128xf32>
    tpu.vector_store %arg15[%c0_21, %c0_22, %c0_23], %44 {strides = array<i32>} : memref<4x1x128xf32, #tpu.memory_space<vmem>>, vector<4x1x128xf32>,
    %cst_24 = arith.constant dense<0.000000e+00> : vector<4x8x128xf32>
    %46 = tpu.matmul %15, %38, %cst_24 {dimension_numbers = #tpu.dot_dimension_numbers<[2], [1], [1], [2], [0, 0, 0, 1, 1, 2], [0], [0]>} : vector<4x8x128xbf16>, vector<4x128x128xbf16>, vector<4x8x128xf32> -> vector<4x8x128xf32>
    %c0_25 = arith.constant 0 : index
    %c0_26 = arith.constant 0 : index
    %c0_27 = arith.constant 0 : index
    %47 = vector.load %arg13[%c0_25, %c0_26, %c0_27] : memref<4x8x128xf32, #tpu.memory_space<vmem>>, vector<4x8x128xf32>
    %48 = vector.broadcast %34 : vector<4x1x128xf32> to vector<4x8x128xf32>
    %49 = arith.mulf %48, %47 : vector<4x8x128xf32>
    %50 = arith.addf %49, %46 : vector<4x8x128xf32>
    %c0_28 = arith.constant 0 : index
    %c0_29 = arith.constant 0 : index
    %c0_30 = arith.constant 0 : index
    %51 = vector.load %arg13[%c0_28, %c0_29, %c0_30] : memref<4x8x128xf32, #tpu.memory_space<vmem>>, vector<4x8x128xf32>
    tpu.vector_store %arg13[%c0_28, %c0_29, %c0_30], %50 {strides = array<i32>} : memref<4x8x128xf32, #tpu.memory_space<vmem>>, vector<4x8x128xf32>,
    %c0_31 = arith.constant 0 : index
    %c0_32 = arith.constant 0 : index
    %c0_33 = arith.constant 0 : index
    %52 = vector.load %arg14[%c0_31, %c0_32, %c0_33] : memref<4x1x128xf32, #tpu.memory_space<vmem>>, vector<4x1x128xf32>
    tpu.vector_store %arg14[%c0_31, %c0_32, %c0_33], %32 {strides = array<i32>} : memref<4x1x128xf32, #tpu.memory_space<vmem>>, vector<4x1x128xf32>,
    %c0_i32_34 = arith.constant 0 : i32
    %53 = arith.cmpi eq, %arg2, %c0_i32_34 : i32
    %54 = arith.extui %53 : i1 to i32
    %c0_i32_35 = arith.constant 0 : i32
    %55 = arith.cmpi ne, %54, %c0_i32_35 : i32
    scf.if %55 {
      %c0_36 = arith.constant 0 : index
      %c0_37 = arith.constant 0 : index
      %c0_38 = arith.constant 0 : index
      %56 = vector.load %arg15[%c0_36, %c0_37, %c0_38] : memref<4x1x128xf32, #tpu.memory_space<vmem>>, vector<4x1x128xf32>
      %57 = tpu.reciprocal %56 : vector<4x1x128xf32> -> vector<4x1x128xf32>
      %c0_39 = arith.constant 0 : index
      %c0_40 = arith.constant 0 : index
      %c0_41 = arith.constant 0 : index
      %58 = vector.load %arg13[%c0_39, %c0_40, %c0_41] : memref<4x8x128xf32, #tpu.memory_space<vmem>>, vector<4x8x128xf32>
      %59 = vector.broadcast %57 : vector<4x1x128xf32> to vector<4x8x128xf32>
      %60 = arith.mulf %58, %59 : vector<4x8x128xf32>
      %61 = vector.shape_cast %60 : vector<4x8x128xf32> to vector<32x128xf32>
      %c0_42 = arith.constant 0 : index
      %c0_43 = arith.constant 0 : index
      %62 = vector.load %arg9[%c0_42, %c0_43] : memref<32x32xbf16, #tpu.memory_space<vmem>>, vector<32x32xbf16>
      %63 = arith.truncf %61 : vector<32x128xf32> to vector<32x128xbf16>
      %cst_44 = arith.constant dense<0.000000e+00> : vector<32x128xf32>
      %64 = tpu.matmul %62, %63, %cst_44 {dimension_numbers = #tpu.dot_dimension_numbers<[1], [0], [0], [1], [0, 0, 1, 1], [], []>} : vector<32x32xbf16>, vector<32x128xbf16>, vector<32x128xf32> -> vector<32x128xf32>
      %c0_45 = arith.constant 0 : index
      %c0_46 = arith.constant 0 : index
      %65 = vector.load %arg10[%c0_45, %c0_46] : memref<32x1xf32, #tpu.memory_space<vmem>>, vector<32x1xf32>
      %66 = vector.broadcast %65 : vector<32x1xf32> to vector<32x128xf32>
      %67 = arith.addf %64, %66 : vector<32x128xf32>
      %c0_47 = arith.constant 0 : index
      %c0_48 = arith.constant 0 : index
      %c0_49 = arith.constant 0 : index
      %68 = vector.load %arg11[%c0_47, %c0_48, %c0_49] : memref<1x32x128xf32, #tpu.memory_space<vmem>>, vector<1x32x128xf32>
      %69 = vector.shape_cast %68 : vector<1x32x128xf32> to vector<32x128xf32>
      %70 = vector.shape_cast %67 : vector<32x128xf32> to vector<1x32x128xf32>
      tpu.vector_store %arg11[%c0_47, %c0_48, %c0_49], %70 {strides = array<i32>} : memref<1x32x128xf32, #tpu.memory_space<vmem>>, vector<1x32x128xf32>,
    } else {
    }
    return
  }
  func.func @transform_0(%arg0: i32, %arg1: i32, %arg2: i32) -> (i32, i32, i32) {
    %c0_i32 = arith.constant 0 : i32
    %c0_i32_0 = arith.constant 0 : i32
    return %arg0, %c0_i32, %arg1 : i32, i32, i32
  }
  func.func @transform_1(%arg0: i32, %arg1: i32, %arg2: i32) -> (i32, i32, i32) {
    %c0_i32 = arith.constant 0 : i32
    %c0_i32_0 = arith.constant 0 : i32
    return %arg0, %c0_i32, %arg2 : i32, i32, i32
  }
  func.func @transform_2(%arg0: i32, %arg1: i32, %arg2: i32) -> (i32, i32) {
    %c0_i32 = arith.constant 0 : i32
    %c0_i32_0 = arith.constant 0 : i32
    %c0_i32_1 = arith.constant 0 : i32
    return %c0_i32, %c0_i32_0 : i32, i32
  }
  func.func @transform_3(%arg0: i32, %arg1: i32, %arg2: i32) -> (i32, i32) {
    %c0_i32 = arith.constant 0 : i32
    %c0_i32_0 = arith.constant 0 : i32
    %c0_i32_1 = arith.constant 0 : i32
    return %c0_i32, %c0_i32_0 : i32, i32
  }
  func.func @transform_4(%arg0: i32, %arg1: i32, %arg2: i32) -> (i32, i32) {
    %c0_i32 = arith.constant 0 : i32
    %c0_i32_0 = arith.constant 0 : i32
    %c0_i32_1 = arith.constant 0 : i32
    return %c0_i32, %c0_i32_0 : i32, i32
  }
  func.func @transform_5(%arg0: i32, %arg1: i32, %arg2: i32) -> (i32, i32) {
    %c0_i32 = arith.constant 0 : i32
    %c0_i32_0 = arith.constant 0 : i32
    %c0_i32_1 = arith.constant 0 : i32
    return %c0_i32, %c0_i32_0 : i32, i32
  }
  func.func @transform_6(%arg0: i32, %arg1: i32, %arg2: i32) -> (i32, i32) {
    %c0_i32 = arith.constant 0 : i32
    %c0_i32_0 = arith.constant 0 : i32
    %c0_i32_1 = arith.constant 0 : i32
    return %c0_i32, %c0_i32_0 : i32, i32
  }
  func.func @transform_7(%arg0: i32, %arg1: i32, %arg2: i32) -> (i32, i32) {
    %c0_i32 = arith.constant 0 : i32
    %c0_i32_0 = arith.constant 0 : i32
    %c0_i32_1 = arith.constant 0 : i32
    return %c0_i32, %c0_i32_0 : i32, i32
  }
  func.func @transform_8(%arg0: i32, %arg1: i32, %arg2: i32) -> (i32, i32, i32) {
    %c0_i32 = arith.constant 0 : i32
    %c0_i32_0 = arith.constant 0 : i32
    return %arg0, %c0_i32, %arg1 : i32, i32, i32
  }
}

</mosaic_0001>

<llo_original>
// kernel: tpu_custom_call.1
$region0: #{tpu_custom_call.1}
  #allocation0 [shape = 'u32[]', space=smem, size = 0x4, offset = 0x4, fixed_abs, tag = 'smem constant byte address 0x4 - core index']
  #allocation1 [shape = 'u32[144,128]{1,0:T(1,128)}', space=vmem, size = 0x12000, scoped, tag = 'internal scratch']
  #allocation2 [shape = 'bf16[4,8,128]{2,1,0:T(8,128)(2,1)}', space=vmem, size = 0x2000, scoped, tag = 'scratch operand']
  #allocation3 [shape = 'f32[4,8,128]{2,1,0:T(8,128)}', space=vmem, size = 0x4000, scoped, tag = 'scratch operand']
  #allocation4 [shape = 'f32[4,1,128]{2,1,0:T(1,128)}', space=vmem, size = 0x800, scoped, tag = 'scratch operand']
  #allocation5 [shape = 'f32[4,1,128]{2,1,0:T(1,128)}', space=vmem, size = 0x800, scoped, tag = 'scratch operand']
  %s0 = inlined_call_operand.vmem [shape: bf16[2,32,128], index: 0, kind: input, shape index: {}]
  %s1 = inlined_call_operand.vmem [shape: bf16[2,32,128], index: 1, kind: input, shape index: {}]
  %s2 = inlined_call_operand.vmem [shape: bf16[32,32], index: 2, kind: input, shape index: {}]
  %s3 = inlined_call_operand.vmem [shape: f32[32,1], index: 3, kind: input, shape index: {}]
  %s4 = inlined_call_operand.vmem [shape: bf16[64,32], index: 4, kind: input, shape index: {}]
  %s5 = inlined_call_operand.vmem [shape: f32[64,1], index: 5, kind: input, shape index: {}]
  %s6 = inlined_call_operand.vmem [shape: bf16[32,32], index: 6, kind: input, shape index: {}]
  %s7 = inlined_call_operand.vmem [shape: f32[32,1], index: 7, kind: input, shape index: {}]
  %s8 = inlined_call_operand.hbm [shape: f32[2,32,128], index: 8, kind: output, shape index: {}]
  %s9 = sld [smem:[#allocation0]]
  $region73: #{tpu_custom_call.1} parent=0
    _
  %s11 = ssub.s32 1, %s9
  %s12 = scalar_select 0, %s11, %s9
  $region1: #{tpu_custom_call.1} parent=0
    #allocation6 [shape = 'u8[32768]{0}', space=vmem, size = 0x8000, scoped, tag = 'output window, operand 0']
    #allocation7 [shape = 's32[2]{0}', space=sflag, size = 0x8, scoped, tag = 'scoped memory for tpu_custom_call.1']
    %13 = vsyncpa [#allocation7], 0
    %s14 = scalar_lea.sflag [#allocation7], 1
    %15 = vsyncpa %s14, 0
    loop: start=0, step=1, limit=4
    $region2: #{tpu_custom_call.1} parent=1 // loop_pre_header
      _
    $region3: #{tpu_custom_call.1} parent=1 // loop_header
      %s17 = sphi 0, %s21
      %p18 = scmp.ge.s32.totalorder %s17, 4
      %s24 = sphi 0, %s43
      %s25 = sphi 0, %s39
      %s26 = sphi 0, %s35
      %s27 = sphi 0, %s24
      %s28 = sphi 0, %s25
      %s29 = sphi 0, %s26
      %s30 = sphi 0, %s27
      %s31 = sphi 0, %s28
      %s32 = sphi 0, %s29
      %s48 = sphi 0, %s50
      %s51 = sphi 0, %s48
      %s52 = sphi 0, %s51
      %s68 = sphi 0, %s52
      %s76 = sphi 0, %s78
      %s79 = sphi 0, %s76
      %s80 = sphi 0, %s79
      %s96 = sphi 0, %s80
      %s100 = sphi 0, %s100
      %s102 = sphi 0, %s100
      %s103 = sphi 0, %s102
      %s117 = sphi 0, %s103
      %s121 = sphi 0, %s121
      %s123 = sphi 0, %s121
      %s124 = sphi 0, %s123
      %s138 = sphi 0, %s124
      %s142 = sphi 0, %s142
      %s144 = sphi 0, %s142
      %s145 = sphi 0, %s144
      %s159 = sphi 0, %s145
      %s163 = sphi 0, %s163
      %s165 = sphi 0, %s163
      %s166 = sphi 0, %s165
      %s180 = sphi 0, %s166
      %s184 = sphi 0, %s184
      %s186 = sphi 0, %s184
      %s187 = sphi 0, %s186
      %s201 = sphi 0, %s187
      %s205 = sphi 0, %s205
      %s207 = sphi 0, %s205
      %s208 = sphi 0, %s207
      %s222 = sphi 0, %s208
      %s230 = sphi 0, %s232
      %s233 = sphi 0, %s230
      %s234 = sphi 0, %s233
      %s250 = sphi 0, %s234
    $region4: #{tpu_custom_call.1} parent=1 // loop_header_branch
      %20 = sbr.rel (%p18) target = $region8
    $region5: #{tpu_custom_call.1} parent=1 // loop_body
      %s22 = ssub.s32 %s17, 1
      %s23 = ssub.s32 %s17, 2
      %s33 = sadd.s32 1, %s26
      %p34 = scmp.ge.s32.totalorder %s33, 1
      %s35 = scalar_select %p34, 0, %s33
      %s36 = sadd.s32 1, %s25
      %s37 = scalar_select %p34, %s36, %s25
      %p38 = scmp.ge.s32.totalorder %s37, 1
      %s39 = scalar_select %p38, 0, %s37
      %s40 = sadd.s32 1, %s24
      %s41 = scalar_select %p38, %s40, %s24
      %p42 = scmp.ge.s32.totalorder %s41, 2
      %s43 = scalar_select %p42, 0, %s41
      %s44 = ssub.s32 %s24, %s43
      %s45 = ssub.s32 %s25, %s39
      %s46 = sor.u32 %s44, %s45
      %p47 = scmp.eq.s32.totalorder %s46, 0
      %s49 = sadd.s32 %s48, 1
      %s50 = scalar_select %p47, %s48, %s49
      %p53 = pneg %p47
      %p54 = scmp.eq.s32.totalorder %s17, 1
      %p55 = por %p53, %p54
      %p56 = scmp.ne.s32.totalorder %s48, %s51
      %p57 = scmp.eq.s32.totalorder %s17, 0
      %p58 = por %p56, %p57
      %p59 = scmp.ne.s32.totalorder %s48, %s51
      %p60 = scmp.eq.s32.totalorder %s22, 1
      %p61 = por %p59, %p60
      %p62 = scmp.ne.s32.totalorder %s51, %s52
      %p63 = scmp.eq.s32.totalorder %s22, 0
      %p64 = por %p62, %p63
      %p65 = scmp.ne.s32.totalorder %s51, %s52
      %p66 = scmp.eq.s32.totalorder %s23, 1
      %p67 = por %p65, %p66
      %p69 = scmp.ne.s32.totalorder %s52, %s68
      %p70 = scmp.eq.s32.totalorder %s23, 0
      %p71 = por %p69, %p70
      %s72 = ssub.s32 %s24, %s43
      %s73 = ssub.s32 %s26, %s35
      %s74 = sor.u32 %s72, %s73
      %p75 = scmp.eq.s32.totalorder %s74, 0
      %s77 = sadd.s32 %s76, 1
      %s78 = scalar_select %p75, %s76, %s77
      %p81 = pneg %p75
      %p82 = scmp.eq.s32.totalorder %s17, 1
      %p83 = por %p81, %p82
      %p84 = scmp.ne.s32.totalorder %s76, %s79
      %p85 = scmp.eq.s32.totalorder %s17, 0
      %p86 = por %p84, %p85
      %p87 = scmp.ne.s32.totalorder %s76, %s79
      %p88 = scmp.eq.s32.totalorder %s22, 1
      %p89 = por %p87, %p88
      %p90 = scmp.ne.s32.totalorder %s79, %s80
      %p91 = scmp.eq.s32.totalorder %s22, 0
      %p92 = por %p90, %p91
      %p93 = scmp.ne.s32.totalorder %s79, %s80
      %p94 = scmp.eq.s32.totalorder %s23, 1
      %p95 = por %p93, %p94
      %p97 = scmp.ne.s32.totalorder %s80, %s96
      %p98 = scmp.eq.s32.totalorder %s23, 0
      %p99 = por %p97, %p98
      %s101 = sadd.s32 %s100, 1
      %p104 = scmp.eq.s32.totalorder %s17, 1
      %p105 = scmp.ne.s32.totalorder %s100, %s102
      %p106 = scmp.eq.s32.totalorder %s17, 0
      %p107 = por %p105, %p106
      %p108 = scmp.ne.s32.totalorder %s100, %s102
      %p109 = scmp.eq.s32.totalorder %s22, 1
      %p110 = por %p108, %p109
      %p111 = scmp.ne.s32.totalorder %s102, %s103
      %p112 = scmp.eq.s32.totalorder %s22, 0
      %p113 = por %p111, %p112
      %p114 = scmp.ne.s32.totalorder %s102, %s103
      %p115 = scmp.eq.s32.totalorder %s23, 1
      %p116 = por %p114, %p115
      %p118 = scmp.ne.s32.totalorder %s103, %s117
      %p119 = scmp.eq.s32.totalorder %s23, 0
      %p120 = por %p118, %p119
      %s122 = sadd.s32 %s121, 1
      %p125 = scmp.eq.s32.totalorder %s17, 1
      %p126 = scmp.ne.s32.totalorder %s121, %s123
      %p127 = scmp.eq.s32.totalorder %s17, 0
      %p128 = por %p126, %p127
      %p129 = scmp.ne.s32.totalorder %s121, %s123
      %p130 = scmp.eq.s32.totalorder %s22, 1
      %p131 = por %p129, %p130
      %p132 = scmp.ne.s32.totalorder %s123, %s124
      %p133 = scmp.eq.s32.totalorder %s22, 0
      %p134 = por %p132, %p133
      %p135 = scmp.ne.s32.totalorder %s123, %s124
      %p136 = scmp.eq.s32.totalorder %s23, 1
      %p137 = por %p135, %p136
      %p139 = scmp.ne.s32.totalorder %s124, %s138
      %p140 = scmp.eq.s32.totalorder %s23, 0
      %p141 = por %p139, %p140
      %s143 = sadd.s32 %s142, 1
      %p146 = scmp.eq.s32.totalorder %s17, 1
      %p147 = scmp.ne.s32.totalorder %s142, %s144
      %p148 = scmp.eq.s32.totalorder %s17, 0
      %p149 = por %p147, %p148
      %p150 = scmp.ne.s32.totalorder %s142, %s144
      %p151 = scmp.eq.s32.totalorder %s22, 1
      %p152 = por %p150, %p151
      %p153 = scmp.ne.s32.totalorder %s144, %s145
      %p154 = scmp.eq.s32.totalorder %s22, 0
      %p155 = por %p153, %p154
      %p156 = scmp.ne.s32.totalorder %s144, %s145
      %p157 = scmp.eq.s32.totalorder %s23, 1
      %p158 = por %p156, %p157
      %p160 = scmp.ne.s32.totalorder %s145, %s159
      %p161 = scmp.eq.s32.totalorder %s23, 0
      %p162 = por %p160, %p161
      %s164 = sadd.s32 %s163, 1
      %p167 = scmp.eq.s32.totalorder %s17, 1
      %p168 = scmp.ne.s32.totalorder %s163, %s165
      %p169 = scmp.eq.s32.totalorder %s17, 0
      %p170 = por %p168, %p169
      %p171 = scmp.ne.s32.totalorder %s163, %s165
      %p172 = scmp.eq.s32.totalorder %s22, 1
      %p173 = por %p171, %p172
      %p174 = scmp.ne.s32.totalorder %s165, %s166
      %p175 = scmp.eq.s32.totalorder %s22, 0
      %p176 = por %p174, %p175
      %p177 = scmp.ne.s32.totalorder %s165, %s166
      %p178 = scmp.eq.s32.totalorder %s23, 1
      %p179 = por %p177, %p178
      %p181 = scmp.ne.s32.totalorder %s166, %s180
      %p182 = scmp.eq.s32.totalorder %s23, 0
      %p183 = por %p181, %p182
      %s185 = sadd.s32 %s184, 1
      %p188 = scmp.eq.s32.totalorder %s17, 1
      %p189 = scmp.ne.s32.totalorder %s184, %s186
      %p190 = scmp.eq.s32.totalorder %s17, 0
      %p191 = por %p189, %p190
      %p192 = scmp.ne.s32.totalorder %s184, %s186
      %p193 = scmp.eq.s32.totalorder %s22, 1
      %p194 = por %p192, %p193
      %p195 = scmp.ne.s32.totalorder %s186, %s187
      %p196 = scmp.eq.s32.totalorder %s22, 0
      %p197 = por %p195, %p196
      %p198 = scmp.ne.s32.totalorder %s186, %s187
      %p199 = scmp.eq.s32.totalorder %s23, 1
      %p200 = por %p198, %p199
      %p202 = scmp.ne.s32.totalorder %s187, %s201
      %p203 = scmp.eq.s32.totalorder %s23, 0
      %p204 = por %p202, %p203
      %s206 = sadd.s32 %s205, 1
      %p209 = scmp.eq.s32.totalorder %s17, 1
      %p210 = scmp.ne.s32.totalorder %s205, %s207
      %p211 = scmp.eq.s32.totalorder %s17, 0
      %p212 = por %p210, %p211
      %p213 = scmp.ne.s32.totalorder %s205, %s207
      %p214 = scmp.eq.s32.totalorder %s22, 1
      %p215 = por %p213, %p214
      %p216 = scmp.ne.s32.totalorder %s207, %s208
      %p217 = scmp.eq.s32.totalorder %s22, 0
      %p218 = por %p216, %p217
      %p219 = scmp.ne.s32.totalorder %s207, %s208
      %p220 = scmp.eq.s32.totalorder %s23, 1
      %p221 = por %p219, %p220
      %p223 = scmp.ne.s32.totalorder %s208, %s222
      %p224 = scmp.eq.s32.totalorder %s23, 0
      %p225 = por %p223, %p224
      %s226 = ssub.s32 %s24, %s43
      %s227 = ssub.s32 %s25, %s39
      %s228 = sor.u32 %s226, %s227
      %p229 = scmp.eq.s32.totalorder %s228, 0
      %s231 = sadd.s32 %s230, 1
      %s232 = scalar_select %p229, %s230, %s231
      %p235 = pneg %p229
      %p236 = scmp.eq.s32.totalorder %s17, 1
      %p237 = por %p235, %p236
      %p238 = scmp.ne.s32.totalorder %s230, %s233
      %p239 = scmp.eq.s32.totalorder %s17, 0
      %p240 = por %p238, %p239
      %p241 = scmp.ne.s32.totalorder %s230, %s233
      %p242 = scmp.eq.s32.totalorder %s22, 1
      %p243 = por %p241, %p242
      %p244 = scmp.ne.s32.totalorder %s233, %s234
      %p245 = scmp.eq.s32.totalorder %s22, 0
      %p246 = por %p244, %p245
      %p247 = scmp.ne.s32.totalorder %s233, %s234
      %p248 = scmp.eq.s32.totalorder %s23, 1
      %p249 = por %p247, %p248
      %p251 = scmp.ne.s32.totalorder %s234, %s250
      %p252 = scmp.eq.s32.totalorder %s23, 0
      %p253 = por %p251, %p252
      %p254 = scmp.le.s32.totalorder 1, %s17
      %p255 = scmp.lt.s32.totalorder %s17, 3
      %p256 = pnand %p254, %p255
      %p257 = pneg %p256
      // Predicated region
      $region9: #{tpu_custom_call.1} parent=5 // pred_check
        _
      $region10: #{tpu_custom_call.1} parent=5 // pred_check_branch
        %259 = sbr.rel (%p256) target = $region12
      $region11: #{tpu_custom_call.1} parent=5 // pred_region
        %s260 = ssub.s32 %s17, 1
        // Predicated region
        $region13: #{tpu_custom_call.1} parent=11 // pred_check
          %p261 = pneg %p113
        $region14: #{tpu_custom_call.1} parent=11 // pred_check_branch
          %263 = sbr.rel (%p261) target = $region16
        $region15: #{tpu_custom_call.1} parent=11 // pred_region
          _
        $region16: #{tpu_custom_call.1} parent=11 // pred_fallthru
          _
        // Predicated region
        $region17: #{tpu_custom_call.1} parent=11 // pred_check
          %p264 = pneg %p134
        $region18: #{tpu_custom_call.1} parent=11 // pred_check_branch
          %266 = sbr.rel (%p264) target = $region20
        $region19: #{tpu_custom_call.1} parent=11 // pred_region
          _
        $region20: #{tpu_custom_call.1} parent=11 // pred_fallthru
          _
        // Predicated region
        $region21: #{tpu_custom_call.1} parent=11 // pred_check
          %p267 = pneg %p155
        $region22: #{tpu_custom_call.1} parent=11 // pred_check_branch
          %269 = sbr.rel (%p267) target = $region24
        $region23: #{tpu_custom_call.1} parent=11 // pred_region
          _
        $region24: #{tpu_custom_call.1} parent=11 // pred_fallthru
          _
        // Predicated region
        $region25: #{tpu_custom_call.1} parent=11 // pred_check
          %p270 = pneg %p176
        $region26: #{tpu_custom_call.1} parent=11 // pred_check_branch
          %272 = sbr.rel (%p270) target = $region28
        $region27: #{tpu_custom_call.1} parent=11 // pred_region
          _
        $region28: #{tpu_custom_call.1} parent=11 // pred_fallthru
          _
        // Predicated region
        $region29: #{tpu_custom_call.1} parent=11 // pred_check
          %p273 = pneg %p197
        $region30: #{tpu_custom_call.1} parent=11 // pred_check_branch
          %275 = sbr.rel (%p273) target = $region32
        $region31: #{tpu_custom_call.1} parent=11 // pred_region
          _
        $region32: #{tpu_custom_call.1} parent=11 // pred_fallthru
          _
        // Predicated region
        $region33: #{tpu_custom_call.1} parent=11 // pred_check
          %p276 = pneg %p218
        $region34: #{tpu_custom_call.1} parent=11 // pred_check_branch
          %278 = sbr.rel (%p276) target = $region36
        $region35: #{tpu_custom_call.1} parent=11 // pred_region
          _
        $region36: #{tpu_custom_call.1} parent=11 // pred_fallthru
          _
      $region12: #{tpu_custom_call.1} parent=5 // pred_fallthru
        _
      %p279 = scmp.lt.s32.totalorder %s17, 2
      // Predicated region
      $region37: #{tpu_custom_call.1} parent=5 // pred_check
        %p280 = pneg %p279
      $region38: #{tpu_custom_call.1} parent=5 // pred_check_branch
        %282 = sbr.rel (%p280) target = $region40
      $region39: #{tpu_custom_call.1} parent=5 // pred_region
        // Predicated region
        $region41: #{tpu_custom_call.1} parent=39 // pred_check
          %p283 = pneg %p58
        $region42: #{tpu_custom_call.1} parent=39 // pred_check_branch
          %285 = sbr.rel (%p283) target = $region44
        $region43: #{tpu_custom_call.1} parent=39 // pred_region
          %p286 = scmp.lt.s32.totalorder %s24, 1
          %s287 = scalar_select %p286, %s24, 1
          %p288 = scmp.lt.s32.totalorder %s25, 0
          %s289 = scalar_select %p288, %s25, 0
          %s290 = smul.addr %s287, 4
          %s291 = sadd.s32 %s289, %s290
          %s292 = smul.addr %s291, 4
          %s293 = scalar_lea.vmem %s0, %s292
        $region44: #{tpu_custom_call.1} parent=39 // pred_fallthru
          _
        // Predicated region
        $region45: #{tpu_custom_call.1} parent=39 // pred_check
          %p294 = pneg %p86
        $region46: #{tpu_custom_call.1} parent=39 // pred_check_branch
          %296 = sbr.rel (%p294) target = $region48
        $region47: #{tpu_custom_call.1} parent=39 // pred_region
          %p297 = scmp.lt.s32.totalorder %s24, 1
          %s298 = scalar_select %p297, %s24, 1
          %p299 = scmp.lt.s32.totalorder %s26, 0
          %s300 = scalar_select %p299, %s26, 0
          %s301 = smul.addr %s298, 4
          %s302 = sadd.s32 %s300, %s301
          %s303 = smul.addr %s302, 4
          %s304 = scalar_lea.vmem %s1, %s303
        $region48: #{tpu_custom_call.1} parent=39 // pred_fallthru
          _
      $region40: #{tpu_custom_call.1} parent=5 // pred_fallthru
        _
      %p305 = scmp.le.s32.totalorder 1, %s17
      %p306 = scmp.lt.s32.totalorder %s17, 3
      %p307 = pnand %p305, %p306
      %p308 = pneg %p307
      // Predicated region
      $region49: #{tpu_custom_call.1} parent=5 // pred_check
        _
      $region50: #{tpu_custom_call.1} parent=5 // pred_check_branch
        %310 = sbr.rel (%p307) target = $region52
      $region51: #{tpu_custom_call.1} parent=5 // pred_region
        %s311 = ssub.s32 %s17, 1
        %p312 = scmp.lt.s32.totalorder %s27, 1
        %s313 = scalar_select %p312, %s27, 1
        %p314 = scmp.lt.s32.totalorder %s28, 0
        %s315 = scalar_select %p314, %s28, 0
        %s316 = smul.addr %s313, 4
        %s317 = sadd.s32 %s315, %s316
        %s318 = smul.addr %s317, 4
        %s319 = scalar_lea.vmem %s0, %s318
        %p320 = pneg %p64
        %p321 = pneg %p61
        %p322 = scmp.lt.s32.totalorder %s27, 1
        %s323 = scalar_select %p322, %s27, 1
        %p324 = scmp.lt.s32.totalorder %s29, 0
        %s325 = scalar_select %p324, %s29, 0
        %s326 = smul.addr %s323, 4
        %s327 = sadd.s32 %s325, %s326
        %s328 = smul.addr %s327, 4
        %s329 = scalar_lea.vmem %s1, %s328
        %p330 = pneg %p92
        %p331 = pneg %p89
        %p332 = pneg %p113
        %p333 = pneg %p110
        %p334 = pneg %p134
        %p335 = pneg %p131
        %p336 = pneg %p155
        %p337 = pneg %p152
        %p338 = pneg %p176
        %p339 = pneg %p173
        %p340 = pneg %p197
        %p341 = pneg %p194
        %p342 = pneg %p218
        %p343 = pneg %p215
        %p344 = pneg %p246
        %p345 = pneg %p243
        %s346 = sand.u32 %s233, 1
        %s347 = scalar_lea.sflag [#allocation7], %s346
        %s348 = sand.u32 %s233, 1
        %s349 = smul.addr %s348, 32
        %s350 = scalar_lea.vmem [#allocation6], %s349
        %p351 = scmp.lt.s32.totalorder %s27, 1
        %s352 = scalar_select %p351, %s27, 1
        %p353 = scmp.lt.s32.totalorder %s28, 0
        %s354 = scalar_select %p353, %s28, 0
        %s355 = smul.addr %s352, 4
        %s356 = sadd.s32 %s354, %s355
        %s357 = smul.addr %s356, 4
        %s358 = scalar_lea.vmem %s0, %s357
        %p359 = scmp.lt.s32.totalorder %s27, 1
        %s360 = scalar_select %p359, %s27, 1
        %p361 = scmp.lt.s32.totalorder %s29, 0
        %s362 = scalar_select %p361, %s29, 0
        %s363 = smul.addr %s360, 4
        %s364 = sadd.s32 %s362, %s363
        %s365 = smul.addr %s364, 4
        %s366 = scalar_lea.vmem %s1, %s365
        %p368 = scmp.eq.s32.totalorder %s29, 0
        // Predicated region
        $region53: #{tpu_custom_call.1} parent=51 // pred_check
          %p369 = pneg %p368
        $region54: #{tpu_custom_call.1} parent=51 // pred_check_branch
          %371 = sbr.rel (%p369) target = $region56
        $region55: #{tpu_custom_call.1} parent=51 // pred_region
          %v372 = vld [vmem:[%s2] sm:$0xf]
          %v373 = vld [vmem:[%s2 + $0x4] sm:$0xf]
          %v374 = vld [vmem:[%s2 + $0x8] sm:$0xf]
          %v375 = vld [vmem:[%s2 + $0xc] sm:$0xf]
          %v376 = vld [vmem:[%s358] sm:$0xf]
          %v377 = vld [vmem:[%s358 + $0x4] sm:$0xf]
          %v378 = vld [vmem:[%s358 + $0x8] sm:$0xf]
          %v379 = vld [vmem:[%s358 + $0xc] sm:$0xf]
          %v380 = vld [vmem:[%s3] sm:$0xff]
          %v381 = vld [vmem:[%s3 + $0x8] sm:$0xff]
          %v382 = vld [vmem:[%s3 + $0x10] sm:$0xff]
          %v383 = vld [vmem:[%s3 + $0x18] sm:$0xff]
          %385 = vset.pattern.permute.xlu0 0
          %386 = vperm.xlu0 %385, %v380
          %v387 = vpop.permute.xlu0 %386
          %390 = vset.pattern.permute.xlu0 0
          %391 = vperm.xlu0 %390, %v381
          %v392 = vpop.permute.xlu0 %391
          %395 = vset.pattern.permute.xlu0 0
          %396 = vperm.xlu0 %395, %v382
          %v397 = vpop.permute.xlu0 %396
          %400 = vset.pattern.permute.xlu0 0
          %401 = vperm.xlu0 %400, %v383
          %v402 = vpop.permute.xlu0 %401
          %v408 = vunpack.c.l.b16 %v372
          %v409 = vunpack.c.l.b16 %v373
          %v410 = vunpack.c.l.b16 %v374
          %v411 = vunpack.c.l.b16 %v375
          %v412 = vpack.c.b16 %v409, %v408
          %v413 = vpack.c.b16 %v411, %v410
          %v418 = vunpack.c.l.b16 %v376
          %v419 = vunpack.c.l.b16 %v377
          %v420 = vunpack.c.l.b16 %v378
          %v421 = vunpack.c.l.b16 %v379
          %v422 = vpack.c.b16 %v419, %v418
          %v423 = vpack.c.b16 %v421, %v420
          %vm426 = vcmask 261120
          %v428 = vsel %vm426, %v412, 0
          %v431 = vsel %vm426, %v413, 0
          %433 = vmatprep.subr.bf16.mxu0 0
          %434 = vmatpush1.bf16.msra.mxu0 %v422
          %435 = vmatprep.subr.bf16.mxu0 0
          %436 = vmatpush1.bf16.msra.mxu0 %v423
          %437 = vmatprep.subr.bf16.mxu0 0
          %438 = vmatpush1.bf16.msra.mxu0 0
          %439 = vmatprep.subr.bf16.mxu0 0
          %440 = vmatpush1.bf16.msra.mxu0 0
          %441 = vmatprep.subr.bf16.mxu0 0
          %442 = vmatpush1.bf16.msra.mxu0 0
          %443 = vmatprep.subr.bf16.mxu0 0
          %444 = vmatpush1.bf16.msra.mxu0 0
          %445 = vmatprep.subr.bf16.mxu0 0
          %446 = vmatpush1.bf16.msra.mxu0 0
          %447 = vmatprep.subr.bf16.mxu0 0
          %448 = vmatpush1.bf16.msra.mxu0 0
          %449 = vmatprep.subr.bf16.mxu0 0
          %450 = vmatpush1.bf16.msra.mxu0 0
          %451 = vmatprep.subr.bf16.mxu0 0
          %452 = vmatpush1.bf16.msra.mxu0 0
          %453 = vmatprep.subr.bf16.mxu0 0
          %454 = vmatpush1.bf16.msra.mxu0 0
          %455 = vmatprep.subr.bf16.mxu0 0
          %456 = vmatpush1.bf16.msra.mxu0 0
          %457 = vmatprep.subr.bf16.mxu0 0
          %458 = vmatpush1.bf16.msra.mxu0 0
          %459 = vmatprep.subr.bf16.mxu0 0
          %460 = vmatpush1.bf16.msra.mxu0 0
          %461 = vmatprep.subr.bf16.mxu0 0
          %462 = vmatpush1.bf16.msra.mxu0 0
          %463 = vmatprep.subr.bf16.mxu0 0
          %464 = vmatpush1.bf16.msra.mxu0 0
          %465 = vmatprep.mubr.bf16.mxu0 0
          %466 = vmatmul.mubr.bf16.gmra.mrb[0].mxu0 %v428
          %v467 = vpop.f32.mrb[0].mxu0
          %v468 = vadd.f32 %v387, %v467
          %v469 = vpop.f32.mrb[0].mxu0
          %v470 = vpop.f32.mrb[0].mxu0
          %v471 = vadd.f32 %v392, %v470
          %v472 = vpop.f32.mrb[0].mxu0
          %473 = vmatprep.mubr.bf16.mxu0 0
          %474 = vmatmul.mubr.bf16.gmra.mrb[0].mxu0 %v431
          %v475 = vpop.f32.mrb[0].mxu0
          %v476 = vadd.f32 %v397, %v475
          %v477 = vpop.f32.mrb[0].mxu0
          %v478 = vpop.f32.mrb[0].mxu0
          %v479 = vadd.f32 %v402, %v478
          %v480 = vpop.f32.mrb[0].mxu0
          %481 = vdwg.mxu0
          %v482 = vpack.c.bf16 %v468, %v468
          %v483 = vpack.c.bf16 %v471, %v471
          %v484 = vpack.c.bf16 %v476, %v476
          %v485 = vpack.c.bf16 %v479, %v479
          %486 = vst [vmem:[#allocation2] sm:$0xf] %v482
          %487 = vst [vmem:[#allocation2 + $0x4] sm:$0xf] %v483
          %488 = vst [vmem:[#allocation2 + $0x8] sm:$0xf] %v484
          %489 = vst [vmem:[#allocation2 + $0xc] sm:$0xf] %v485
          %490 = vst [vmem:[#allocation3] sm:$0xff] 0.0
          %491 = vst [vmem:[#allocation3 + $0x8] sm:$0xff] 0.0
          %492 = vst [vmem:[#allocation3 + $0x10] sm:$0xff] 0.0
          %493 = vst [vmem:[#allocation3 + $0x18] sm:$0xff] 0.0
          %494 = vst [vmem:[#allocation4] sm:$0x1] -inf
          %495 = vst [vmem:[#allocation4 + $0x1] sm:$0x1] -inf
          %496 = vst [vmem:[#allocation4 + $0x2] sm:$0x1] -inf
          %497 = vst [vmem:[#allocation4 + $0x3] sm:$0x1] -inf
          %498 = vst [vmem:[#allocation5] sm:$0x1] 0.0
          %499 = vst [vmem:[#allocation5 + $0x1] sm:$0x1] 0.0
          %500 = vst [vmem:[#allocation5 + $0x2] sm:$0x1] 0.0
          %501 = vst [vmem:[#allocation5 + $0x3] sm:$0x1] 0.0
        $region56: #{tpu_custom_call.1} parent=51 // pred_fallthru
          _
        %v502 = vld [vmem:[%s4] sm:$0xf]
        %v503 = vld [vmem:[%s4 + $0x4] sm:$0xf]
        %v504 = vld [vmem:[%s4 + $0x8] sm:$0xf]
        %v505 = vld [vmem:[%s4 + $0xc] sm:$0xf]
        %v506 = vld [vmem:[%s4 + $0x10] sm:$0xf]
        %v507 = vld [vmem:[%s4 + $0x14] sm:$0xf]
        %v508 = vld [vmem:[%s4 + $0x18] sm:$0xf]
        %v509 = vld [vmem:[%s4 + $0x1c] sm:$0xf]
        %v510 = vld [vmem:[%s366] sm:$0xf]
        %v511 = vld [vmem:[%s366 + $0x4] sm:$0xf]
        %v512 = vld [vmem:[%s366 + $0x8] sm:$0xf]
        %v513 = vld [vmem:[%s366 + $0xc] sm:$0xf]
        %v514 = vld [vmem:[%s5] sm:$0xff]
        %v515 = vld [vmem:[%s5 + $0x8] sm:$0xff]
        %v516 = vld [vmem:[%s5 + $0x10] sm:$0xff]
        %v517 = vld [vmem:[%s5 + $0x18] sm:$0xff]
        %v518 = vld [vmem:[%s5 + $0x20] sm:$0xff]
        %v519 = vld [vmem:[%s5 + $0x28] sm:$0xff]
        %v520 = vld [vmem:[%s5 + $0x30] sm:$0xff]
        %v521 = vld [vmem:[%s5 + $0x38] sm:$0xff]
        %523 = vset.pattern.permute.xlu0 0
        %524 = vperm.xlu0 %523, %v514
        %v525 = vpop.permute.xlu0 %524
        %528 = vset.pattern.permute.xlu0 0
        %529 = vperm.xlu0 %528, %v515
        %v530 = vpop.permute.xlu0 %529
        %533 = vset.pattern.permute.xlu0 0
        %534 = vperm.xlu0 %533, %v516
        %v535 = vpop.permute.xlu0 %534
        %538 = vset.pattern.permute.xlu0 0
        %539 = vperm.xlu0 %538, %v517
        %v540 = vpop.permute.xlu0 %539
        %543 = vset.pattern.permute.xlu0 0
        %544 = vperm.xlu0 %543, %v518
        %v545 = vpop.permute.xlu0 %544
        %548 = vset.pattern.permute.xlu0 0
        %549 = vperm.xlu0 %548, %v519
        %v550 = vpop.permute.xlu0 %549
        %553 = vset.pattern.permute.xlu0 0
        %554 = vperm.xlu0 %553, %v520
        %v555 = vpop.permute.xlu0 %554
        %558 = vset.pattern.permute.xlu0 0
        %559 = vperm.xlu0 %558, %v521
        %v560 = vpop.permute.xlu0 %559
        %v570 = vunpack.c.l.b16 %v502
        %v571 = vunpack.c.l.b16 %v503
        %v572 = vunpack.c.l.b16 %v504
        %v573 = vunpack.c.l.b16 %v505
        %v574 = vunpack.c.l.b16 %v506
        %v575 = vunpack.c.l.b16 %v507
        %v576 = vunpack.c.l.b16 %v508
        %v577 = vunpack.c.l.b16 %v509
        %v578 = vpack.c.b16 %v571, %v570
        %v579 = vpack.c.b16 %v573, %v572
        %v580 = vpack.c.b16 %v575, %v574
        %v581 = vpack.c.b16 %v577, %v576
        %v586 = vunpack.c.l.b16 %v510
        %v587 = vunpack.c.l.b16 %v511
        %v588 = vunpack.c.l.b16 %v512
        %v589 = vunpack.c.l.b16 %v513
        %v590 = vpack.c.b16 %v587, %v586
        %v591 = vpack.c.b16 %v589, %v588
        %vm594 = vcmask 261120
        %v596 = vsel %vm594, %v578, 0
        %v599 = vsel %vm594, %v579, 0
        %v602 = vsel %vm594, %v580, 0
        %v605 = vsel %vm594, %v581, 0
        %607 = vmatprep.subr.bf16.mxu0 0
        %608 = vmatpush1.bf16.msra.mxu0 %v590
        %609 = vmatprep.subr.bf16.mxu0 0
        %610 = vmatpush1.bf16.msra.mxu0 %v591
        %611 = vmatprep.subr.bf16.mxu0 0
        %612 = vmatpush1.bf16.msra.mxu0 0
        %613 = vmatprep.subr.bf16.mxu0 0
        %614 = vmatpush1.bf16.msra.mxu0 0
        %615 = vmatprep.subr.bf16.mxu0 0
        %616 = vmatpush1.bf16.msra.mxu0 0
        %617 = vmatprep.subr.bf16.mxu0 0
        %618 = vmatpush1.bf16.msra.mxu0 0
        %619 = vmatprep.subr.bf16.mxu0 0
        %620 = vmatpush1.bf16.msra.mxu0 0
        %621 = vmatprep.subr.bf16.mxu0 0
        %622 = vmatpush1.bf16.msra.mxu0 0
        %623 = vmatprep.subr.bf16.mxu0 0
        %624 = vmatpush1.bf16.msra.mxu0 0
        %625 = vmatprep.subr.bf16.mxu0 0
        %626 = vmatpush1.bf16.msra.mxu0 0
        %627 = vmatprep.subr.bf16.mxu0 0
        %628 = vmatpush1.bf16.msra.mxu0 0
        %629 = vmatprep.subr.bf16.mxu0 0
        %630 = vmatpush1.bf16.msra.mxu0 0
        %631 = vmatprep.subr.bf16.mxu0 0
        %632 = vmatpush1.bf16.msra.mxu0 0
        %633 = vmatprep.subr.bf16.mxu0 0
        %634 = vmatpush1.bf16.msra.mxu0 0
        %635 = vmatprep.subr.bf16.mxu0 0
        %636 = vmatpush1.bf16.msra.mxu0 0
        %637 = vmatprep.subr.bf16.mxu0 0
        %638 = vmatpush1.bf16.msra.mxu0 0
        %639 = vmatprep.mubr.bf16.mxu0 0
        %640 = vmatmul.mubr.bf16.gmra.mrb[0].mxu0 %v596
        %v641 = vpop.f32.mrb[0].mxu0
        %v642 = vadd.f32 %v525, %v641
        %v643 = vpop.f32.mrb[0].mxu0
        %v644 = vpop.f32.mrb[0].mxu0
        %v645 = vadd.f32 %v530, %v644
        %v646 = vpop.f32.mrb[0].mxu0
        %647 = vmatprep.mubr.bf16.mxu0 0
        %648 = vmatmul.mubr.bf16.gmra.mrb[0].mxu0 %v599
        %v649 = vpop.f32.mrb[0].mxu0
        %v650 = vadd.f32 %v535, %v649
        %v651 = vpop.f32.mrb[0].mxu0
        %v652 = vpop.f32.mrb[0].mxu0
        %v653 = vadd.f32 %v540, %v652
        %v654 = vpop.f32.mrb[0].mxu0
        %655 = vmatprep.mubr.bf16.mxu0 0
        %656 = vmatmul.mubr.bf16.gmra.mrb[0].mxu0 %v602
        %v657 = vpop.f32.mrb[0].mxu0
        %v658 = vadd.f32 %v545, %v657
        %v659 = vpop.f32.mrb[0].mxu0
        %v660 = vpop.f32.mrb[0].mxu0
        %v661 = vadd.f32 %v550, %v660
        %v662 = vpop.f32.mrb[0].mxu0
        %663 = vmatprep.mubr.bf16.mxu0 0
        %664 = vmatmul.mubr.bf16.gmra.mrb[0].mxu0 %v605
        %v665 = vpop.f32.mrb[0].mxu0
        %v666 = vadd.f32 %v555, %v665
        %v667 = vpop.f32.mrb[0].mxu0
        %v668 = vpop.f32.mrb[0].mxu0
        %v669 = vadd.f32 %v560, %v668
        %v670 = vpop.f32.mrb[0].mxu0
        %671 = vdwg.mxu0
        %v672 = vpack.c.bf16 %v642, %v642
        %v673 = vpack.c.bf16 %v645, %v645
        %v674 = vpack.c.bf16 %v650, %v650
        %v675 = vpack.c.bf16 %v653, %v653
        %v676 = vpack.c.bf16 %v658, %v658
        %v677 = vpack.c.bf16 %v661, %v661
        %v678 = vpack.c.bf16 %v666, %v666
        %v679 = vpack.c.bf16 %v669, %v669
        %v680 = vld [vmem:[#allocation2] sm:$0xf]
        %v681 = vld [vmem:[#allocation2 + $0x4] sm:$0xf]
        %v682 = vld [vmem:[#allocation2 + $0x8] sm:$0xf]
        %v683 = vld [vmem:[#allocation2 + $0xc] sm:$0xf]
        %v684 = vlaneseq
        %v685 = vshrl.u32 %v684, 7
        %v686 = vadd.s32 %v685, 8
        %v687 = vadd.s32 %v685, 16
        %v688 = vadd.s32 %v685, 24
        %v689 = vadd.s32 %v685, 32
        %v690 = vadd.s32 %v685, 40
        %v691 = vadd.s32 %v685, 48
        %v692 = vadd.s32 %v685, 56
        %v693 = vadd.s32 %v685, 64
        %v694 = vadd.s32 %v685, 72
        %v695 = vadd.s32 %v685, 80
        %v696 = vadd.s32 %v685, 88
        %v697 = vadd.s32 %v685, 96
        %v698 = vadd.s32 %v685, 104
        %v699 = vadd.s32 %v685, 112
        %v700 = vadd.s32 %v685, 120
        %s701 = smul.u32 %s29, 128
        %v702 = vstv %s701
        %v703 = vadd.s32 %v685, %v702
        %v704 = vadd.s32 %v686, %v702
        %v705 = vadd.s32 %v687, %v702
        %v706 = vadd.s32 %v688, %v702
        %v707 = vadd.s32 %v689, %v702
        %v708 = vadd.s32 %v690, %v702
        %v709 = vadd.s32 %v691, %v702
        %v710 = vadd.s32 %v692, %v702
        %v711 = vadd.s32 %v693, %v702
        %v712 = vadd.s32 %v694, %v702
        %v713 = vadd.s32 %v695, %v702
        %v714 = vadd.s32 %v696, %v702
        %v715 = vadd.s32 %v697, %v702
        %v716 = vadd.s32 %v698, %v702
        %v717 = vadd.s32 %v699, %v702
        %v718 = vadd.s32 %v700, %v702
        %vm719 = vcmp.lt.s32.totalorder %v703, 64
        %vm720 = vcmp.lt.s32.totalorder %v704, 64
        %vm721 = vcmp.lt.s32.totalorder %v705, 64
        %vm722 = vcmp.lt.s32.totalorder %v706, 64
        %vm723 = vcmp.lt.s32.totalorder %v707, 64
        %vm724 = vcmp.lt.s32.totalorder %v708, 64
        %vm725 = vcmp.lt.s32.totalorder %v709, 64
        %vm726 = vcmp.lt.s32.totalorder %v710, 64
        %vm727 = vcmp.lt.s32.totalorder %v711, 64
        %vm728 = vcmp.lt.s32.totalorder %v712, 64
        %vm729 = vcmp.lt.s32.totalorder %v713, 64
        %vm730 = vcmp.lt.s32.totalorder %v714, 64
        %vm731 = vcmp.lt.s32.totalorder %v715, 64
        %vm732 = vcmp.lt.s32.totalorder %v716, 64
        %vm733 = vcmp.lt.s32.totalorder %v717, 64
        %vm734 = vcmp.lt.s32.totalorder %v718, 64
        %v735 = vsel %vm719, 0.0, -1e+30
        %v736 = vsel %vm720, 0.0, -1e+30
        %v737 = vsel %vm721, 0.0, -1e+30
        %v738 = vsel %vm722, 0.0, -1e+30
        %v739 = vsel %vm723, 0.0, -1e+30
        %v740 = vsel %vm724, 0.0, -1e+30
        %v741 = vsel %vm725, 0.0, -1e+30
        %v742 = vsel %vm726, 0.0, -1e+30
        %v743 = vsel %vm727, 0.0, -1e+30
        %v744 = vsel %vm728, 0.0, -1e+30
        %v745 = vsel %vm729, 0.0, -1e+30
        %v746 = vsel %vm730, 0.0, -1e+30
        %v747 = vsel %vm731, 0.0, -1e+30
        %v748 = vsel %vm732, 0.0, -1e+30
        %v749 = vsel %vm733, 0.0, -1e+30
        %v750 = vsel %vm734, 0.0, -1e+30
        %751 = vxpose.xlu0.c.b16.start [1/8] %v672, 128
        %752 = vxpose.xlu0.c.b16.cont [2/8] 0, 128
        %753 = vxpose.xlu0.c.b16.cont [3/8] 0, 128
        %754 = vxpose.xlu0.c.b16.cont [4/8] 0, 128
        %755 = vxpose.xlu0.c.b16.cont [5/8] 0, 128
        %756 = vxpose.xlu0.c.b16.cont [6/8] 0, 128
        %757 = vxpose.xlu0.c.b16.cont [7/8] 0, 128
        %758 = vxpose.xlu0.c.b16.end [8/8] 0, 128
        %v759 = vpop.trf.xlu0
        %v760 = vpop.trf.xlu0
        %v761 = vpop.trf.xlu0
        %v762 = vpop.trf.xlu0
        %v763 = vpop.trf.xlu0
        %v764 = vpop.trf.xlu0
        %v765 = vpop.trf.xlu0
        %v766 = vpop.trf.xlu0
        %vm767 = vcmask 64512
        %v769 = vsel %vm767, %v759, 0
        %v772 = vsel %vm767, %v760, 0
        %v775 = vsel %vm767, %v761, 0
        %v778 = vsel %vm767, %v762, 0
        %v781 = vsel %vm767, %v763, 0
        %v784 = vsel %vm767, %v764, 0
        %v787 = vsel %vm767, %v765, 0
        %v790 = vsel %vm767, %v766, 0
        %vm792 = vcmask 1043456
        %v794 = vsel %vm792, %v680, 0
        %796 = vmatprep.subr.bf16.mxu0 0
        %797 = vmatpush1.bf16.msra.mxu0 %v794
        %798 = vmatprep.subr.bf16.mxu0 0
        %799 = vmatpush1.bf16.msra.mxu0 0
        %800 = vmatprep.subr.bf16.mxu0 0
        %801 = vmatpush1.bf16.msra.mxu0 0
        %802 = vmatprep.subr.bf16.mxu0 0
        %803 = vmatpush1.bf16.msra.mxu0 0
        %804 = vmatprep.subr.bf16.mxu0 0
        %805 = vmatpush1.bf16.msra.mxu0 0
        %806 = vmatprep.subr.bf16.mxu0 0
        %807 = vmatpush1.bf16.msra.mxu0 0
        %808 = vmatprep.subr.bf16.mxu0 0
        %809 = vmatpush1.bf16.msra.mxu0 0
        %810 = vmatprep.subr.bf16.mxu0 0
        %811 = vmatpush1.bf16.msra.mxu0 0
        %812 = vmatprep.subr.bf16.mxu0 0
        %813 = vmatpush1.bf16.msra.mxu0 0
        %814 = vmatprep.subr.bf16.mxu0 0
        %815 = vmatpush1.bf16.msra.mxu0 0
        %816 = vmatprep.subr.bf16.mxu0 0
        %817 = vmatpush1.bf16.msra.mxu0 0
        %818 = vmatprep.subr.bf16.mxu0 0
        %819 = vmatpush1.bf16.msra.mxu0 0
        %820 = vmatprep.subr.bf16.mxu0 0
        %821 = vmatpush1.bf16.msra.mxu0 0
        %822 = vmatprep.subr.bf16.mxu0 0
        %823 = vmatpush1.bf16.msra.mxu0 0
        %824 = vmatprep.subr.bf16.mxu0 0
        %825 = vmatpush1.bf16.msra.mxu0 0
        %826 = vmatprep.subr.bf16.mxu0 0
        %827 = vmatpush1.bf16.msra.mxu0 0
        %828 = vmatprep.mubr.bf16.mxu0 0
        %829 = vmatmul.mubr.bf16.gmra.mrb[0].mxu0 %v769
        %v830 = vpop.f32.mrb[0].mxu0
        %v831 = vadd.f32 %v735, %v830
        %v832 = vpop.f32.mrb[0].mxu0
        %v833 = vpop.f32.mrb[0].mxu0
        %v834 = vadd.f32 %v736, %v833
        %v835 = vpop.f32.mrb[0].mxu0
        %836 = vmatprep.mubr.bf16.mxu0 0
        %837 = vmatmul.mubr.bf16.gmra.mrb[0].mxu0 %v772
        %v838 = vpop.f32.mrb[0].mxu0
        %v839 = vadd.f32 %v737, %v838
        %v840 = vpop.f32.mrb[0].mxu0
        %v841 = vpop.f32.mrb[0].mxu0
        %v842 = vadd.f32 %v738, %v841
        %v843 = vpop.f32.mrb[0].mxu0
        %844 = vmatprep.mubr.bf16.mxu0 0
        %845 = vmatmul.mubr.bf16.gmra.mrb[0].mxu0 %v775
        %v846 = vpop.f32.mrb[0].mxu0
        %v847 = vadd.f32 %v739, %v846
        %v848 = vpop.f32.mrb[0].mxu0
        %v849 = vpop.f32.mrb[0].mxu0
        %v850 = vadd.f32 %v740, %v849
        %v851 = vpop.f32.mrb[0].mxu0
        %852 = vmatprep.mubr.bf16.mxu0 0
        %853 = vmatmul.mubr.bf16.gmra.mrb[0].mxu0 %v778
        %v854 = vpop.f32.mrb[0].mxu0
        %v855 = vadd.f32 %v741, %v854
        %v856 = vpop.f32.mrb[0].mxu0
        %v857 = vpop.f32.mrb[0].mxu0
        %v858 = vadd.f32 %v742, %v857
        %v859 = vpop.f32.mrb[0].mxu0
        %860 = vmatprep.mubr.bf16.mxu0 0
        %861 = vmatmul.mubr.bf16.gmra.mrb[0].mxu0 %v781
        %v862 = vpop.f32.mrb[0].mxu0
        %v863 = vadd.f32 %v743, %v862
        %v864 = vpop.f32.mrb[0].mxu0
        %v865 = vpop.f32.mrb[0].mxu0
        %v866 = vadd.f32 %v744, %v865
        %v867 = vpop.f32.mrb[0].mxu0
        %868 = vmatprep.mubr.bf16.mxu0 0
        %869 = vmatmul.mubr.bf16.gmra.mrb[0].mxu0 %v784
        %v870 = vpop.f32.mrb[0].mxu0
        %v871 = vadd.f32 %v745, %v870
        %v872 = vpop.f32.mrb[0].mxu0
        %v873 = vpop.f32.mrb[0].mxu0
        %v874 = vadd.f32 %v746, %v873
        %v875 = vpop.f32.mrb[0].mxu0
        %876 = vmatprep.mubr.bf16.mxu0 0
        %877 = vmatmul.mubr.bf16.gmra.mrb[0].mxu0 %v787
        %v878 = vpop.f32.mrb[0].mxu0
        %v879 = vadd.f32 %v747, %v878
        %v880 = vpop.f32.mrb[0].mxu0
        %v881 = vpop.f32.mrb[0].mxu0
        %v882 = vadd.f32 %v748, %v881
        %v883 = vpop.f32.mrb[0].mxu0
        %884 = vmatprep.mubr.bf16.mxu0 0
        %885 = vmatmul.mubr.bf16.gmra.mrb[0].mxu0 %v790
        %v886 = vpop.f32.mrb[0].mxu0
        %v887 = vadd.f32 %v749, %v886
        %v888 = vpop.f32.mrb[0].mxu0
        %v889 = vpop.f32.mrb[0].mxu0
        %v890 = vadd.f32 %v750, %v889
        %v891 = vpop.f32.mrb[0].mxu0
        %892 = vdwg.mxu0
        %893 = vxpose.xlu0.c.b16.start [1/8] %v673, 128
        %894 = vxpose.xlu0.c.b16.cont [2/8] 0, 128
        %895 = vxpose.xlu0.c.b16.cont [3/8] 0, 128
        %896 = vxpose.xlu0.c.b16.cont [4/8] 0, 128
        %897 = vxpose.xlu0.c.b16.cont [5/8] 0, 128
        %898 = vxpose.xlu0.c.b16.cont [6/8] 0, 128
        %899 = vxpose.xlu0.c.b16.cont [7/8] 0, 128
        %900 = vxpose.xlu0.c.b16.end [8/8] 0, 128
        %v901 = vpop.trf.xlu0
        %v902 = vpop.trf.xlu0
        %v903 = vpop.trf.xlu0
        %v904 = vpop.trf.xlu0
        %v905 = vpop.trf.xlu0
        %v906 = vpop.trf.xlu0
        %v907 = vpop.trf.xlu0
        %v908 = vpop.trf.xlu0
        %v910 = vsel %vm767, %v901, 0
        %v913 = vsel %vm767, %v902, 0
        %v916 = vsel %vm767, %v903, 0
        %v919 = vsel %vm767, %v904, 0
        %v922 = vsel %vm767, %v905, 0
        %v925 = vsel %vm767, %v906, 0
        %v928 = vsel %vm767, %v907, 0
        %v931 = vsel %vm767, %v908, 0
        %v934 = vsel %vm792, %v681, 0
        %936 = vmatprep.subr.bf16.mxu0 0
        %937 = vmatpush1.bf16.msra.mxu0 %v934
        %938 = vmatprep.subr.bf16.mxu0 0
        %939 = vmatpush1.bf16.msra.mxu0 0
        %940 = vmatprep.subr.bf16.mxu0 0
        %941 = vmatpush1.bf16.msra.mxu0 0
        %942 = vmatprep.subr.bf16.mxu0 0
        %943 = vmatpush1.bf16.msra.mxu0 0
        %944 = vmatprep.subr.bf16.mxu0 0
        %945 = vmatpush1.bf16.msra.mxu0 0
        %946 = vmatprep.subr.bf16.mxu0 0
        %947 = vmatpush1.bf16.msra.mxu0 0
        %948 = vmatprep.subr.bf16.mxu0 0
        %949 = vmatpush1.bf16.msra.mxu0 0
        %950 = vmatprep.subr.bf16.mxu0 0
        %951 = vmatpush1.bf16.msra.mxu0 0
        %952 = vmatprep.subr.bf16.mxu0 0
        %953 = vmatpush1.bf16.msra.mxu0 0
        %954 = vmatprep.subr.bf16.mxu0 0
        %955 = vmatpush1.bf16.msra.mxu0 0
        %956 = vmatprep.subr.bf16.mxu0 0
        %957 = vmatpush1.bf16.msra.mxu0 0
        %958 = vmatprep.subr.bf16.mxu0 0
        %959 = vmatpush1.bf16.msra.mxu0 0
        %960 = vmatprep.subr.bf16.mxu0 0
        %961 = vmatpush1.bf16.msra.mxu0 0
        %962 = vmatprep.subr.bf16.mxu0 0
        %963 = vmatpush1.bf16.msra.mxu0 0
        %964 = vmatprep.subr.bf16.mxu0 0
        %965 = vmatpush1.bf16.msra.mxu0 0
        %966 = vmatprep.subr.bf16.mxu0 0
        %967 = vmatpush1.bf16.msra.mxu0 0
        %968 = vmatprep.mubr.bf16.mxu0 0
        %969 = vmatmul.mubr.bf16.gmra.mrb[0].mxu0 %v910
        %v970 = vpop.f32.mrb[0].mxu0
        %v971 = vadd.f32 %v735, %v970
        %v972 = vpop.f32.mrb[0].mxu0
        %v973 = vpop.f32.mrb[0].mxu0
        %v974 = vadd.f32 %v736, %v973
        %v975 = vpop.f32.mrb[0].mxu0
        %976 = vmatprep.mubr.bf16.mxu0 0
        %977 = vmatmul.mubr.bf16.gmra.mrb[0].mxu0 %v913
        %v978 = vpop.f32.mrb[0].mxu0
        %v979 = vadd.f32 %v737, %v978
        %v980 = vpop.f32.mrb[0].mxu0
        %v981 = vpop.f32.mrb[0].mxu0
        %v982 = vadd.f32 %v738, %v981
        %v983 = vpop.f32.mrb[0].mxu0
        %984 = vmatprep.mubr.bf16.mxu0 0
        %985 = vmatmul.mubr.bf16.gmra.mrb[0].mxu0 %v916
        %v986 = vpop.f32.mrb[0].mxu0
        %v987 = vadd.f32 %v739, %v986
        %v988 = vpop.f32.mrb[0].mxu0
        %v989 = vpop.f32.mrb[0].mxu0
        %v990 = vadd.f32 %v740, %v989
        %v991 = vpop.f32.mrb[0].mxu0
        %992 = vmatprep.mubr.bf16.mxu0 0
        %993 = vmatmul.mubr.bf16.gmra.mrb[0].mxu0 %v919
        %v994 = vpop.f32.mrb[0].mxu0
        %v995 = vadd.f32 %v741, %v994
        %v996 = vpop.f32.mrb[0].mxu0
        %v997 = vpop.f32.mrb[0].mxu0
        %v998 = vadd.f32 %v742, %v997
        %v999 = vpop.f32.mrb[0].mxu0
        %1000 = vmatprep.mubr.bf16.mxu0 0
        %1001 = vmatmul.mubr.bf16.gmra.mrb[0].mxu0 %v922
        %v1002 = vpop.f32.mrb[0].mxu0
        %v1003 = vadd.f32 %v743, %v1002
        %v1004 = vpop.f32.mrb[0].mxu0
        %v1005 = vpop.f32.mrb[0].mxu0
        %v1006 = vadd.f32 %v744, %v1005
        %v1007 = vpop.f32.mrb[0].mxu0
        %1008 = vmatprep.mubr.bf16.mxu0 0
        %1009 = vmatmul.mubr.bf16.gmra.mrb[0].mxu0 %v925
        %v1010 = vpop.f32.mrb[0].mxu0
        %v1011 = vadd.f32 %v745, %v1010
        %v1012 = vpop.f32.mrb[0].mxu0
        %v1013 = vpop.f32.mrb[0].mxu0
        %v1014 = vadd.f32 %v746, %v1013
        %v1015 = vpop.f32.mrb[0].mxu0
        %1016 = vmatprep.mubr.bf16.mxu0 0
        %1017 = vmatmul.mubr.bf16.gmra.mrb[0].mxu0 %v928
        %v1018 = vpop.f32.mrb[0].mxu0
        %v1019 = vadd.f32 %v747, %v1018
        %v1020 = vpop.f32.mrb[0].mxu0
        %v1021 = vpop.f32.mrb[0].mxu0
        %v1022 = vadd.f32 %v748, %v1021
        %v1023 = vpop.f32.mrb[0].mxu0
        %1024 = vmatprep.mubr.bf16.mxu0 0
        %1025 = vmatmul.mubr.bf16.gmra.mrb[0].mxu0 %v931
        %v1026 = vpop.f32.mrb[0].mxu0
        %v1027 = vadd.f32 %v749, %v1026
        %v1028 = vpop.f32.mrb[0].mxu0
        %v1029 = vpop.f32.mrb[0].mxu0
        %v1030 = vadd.f32 %v750, %v1029
        %v1031 = vpop.f32.mrb[0].mxu0
        %1032 = vdwg.mxu0
        %1033 = vxpose.xlu0.c.b16.start [1/8] %v674, 128
        %1034 = vxpose.xlu0.c.b16.cont [2/8] 0, 128
        %1035 = vxpose.xlu0.c.b16.cont [3/8] 0, 128
        %1036 = vxpose.xlu0.c.b16.cont [4/8] 0, 128
        %1037 = vxpose.xlu0.c.b16.cont [5/8] 0, 128
        %1038 = vxpose.xlu0.c.b16.cont [6/8] 0, 128
        %1039 = vxpose.xlu0.c.b16.cont [7/8] 0, 128
        %1040 = vxpose.xlu0.c.b16.end [8/8] 0, 128
        %v1041 = vpop.trf.xlu0
        %v1042 = vpop.trf.xlu0
        %v1043 = vpop.trf.xlu0
        %v1044 = vpop.trf.xlu0
        %v1045 = vpop.trf.xlu0
        %v1046 = vpop.trf.xlu0
        %v1047 = vpop.trf.xlu0
        %v1048 = vpop.trf.xlu0
        %v1050 = vsel %vm767, %v1041, 0
        %v1053 = vsel %vm767, %v1042, 0
        %v1056 = vsel %vm767, %v1043, 0
        %v1059 = vsel %vm767, %v1044, 0
        %v1062 = vsel %vm767, %v1045, 0
        %v1065 = vsel %vm767, %v1046, 0
        %v1068 = vsel %vm767, %v1047, 0
        %v1071 = vsel %vm767, %v1048, 0
        %v1074 = vsel %vm792, %v682, 0
        %1076 = vmatprep.subr.bf16.mxu0 0
        %1077 = vmatpush1.bf16.msra.mxu0 %v1074
        %1078 = vmatprep.subr.bf16.mxu0 0
        %1079 = vmatpush1.bf16.msra.mxu0 0
        %1080 = vmatprep.subr.bf16.mxu0 0
        %1081 = vmatpush1.bf16.msra.mxu0 0
        %1082 = vmatprep.subr.bf16.mxu0 0
        %1083 = vmatpush1.bf16.msra.mxu0 0
        %1084 = vmatprep.subr.bf16.mxu0 0
        %1085 = vmatpush1.bf16.msra.mxu0 0
        %1086 = vmatprep.subr.bf16.mxu0 0
        %1087 = vmatpush1.bf16.msra.mxu0 0
        %1088 = vmatprep.subr.bf16.mxu0 0
        %1089 = vmatpush1.bf16.msra.mxu0 0
        %1090 = vmatprep.subr.bf16.mxu0 0
        %1091 = vmatpush1.bf16.msra.mxu0 0
        %1092 = vmatprep.subr.bf16.mxu0 0
        %1093 = vmatpush1.bf16.msra.mxu0 0
        %1094 = vmatprep.subr.bf16.mxu0 0
        %1095 = vmatpush1.bf16.msra.mxu0 0
        %1096 = vmatprep.subr.bf16.mxu0 0
        %1097 = vmatpush1.bf16.msra.mxu0 0
        %1098 = vmatprep.subr.bf16.mxu0 0
        %1099 = vmatpush1.bf16.msra.mxu0 0
        %1100 = vmatprep.subr.bf16.mxu0 0
        %1101 = vmatpush1.bf16.msra.mxu0 0
        %1102 = vmatprep.subr.bf16.mxu0 0
        %1103 = vmatpush1.bf16.msra.mxu0 0
        %1104 = vmatprep.subr.bf16.mxu0 0
        %1105 = vmatpush1.bf16.msra.mxu0 0
        %1106 = vmatprep.subr.bf16.mxu0 0
        %1107 = vmatpush1.bf16.msra.mxu0 0
        %1108 = vmatprep.mubr.bf16.mxu0 0
        %1109 = vmatmul.mubr.bf16.gmra.mrb[0].mxu0 %v1050
        %v1110 = vpop.f32.mrb[0].mxu0
        %v1111 = vadd.f32 %v735, %v1110
        %v1112 = vpop.f32.mrb[0].mxu0
        %v1113 = vpop.f32.mrb[0].mxu0
        %v1114 = vadd.f32 %v736, %v1113
        %v1115 = vpop.f32.mrb[0].mxu0
        %1116 = vmatprep.mubr.bf16.mxu0 0
        %1117 = vmatmul.mubr.bf16.gmra.mrb[0].mxu0 %v1053
        %v1118 = vpop.f32.mrb[0].mxu0
        %v1119 = vadd.f32 %v737, %v1118
        %v1120 = vpop.f32.mrb[0].mxu0
        %v1121 = vpop.f32.mrb[0].mxu0
        %v1122 = vadd.f32 %v738, %v1121
        %v1123 = vpop.f32.mrb[0].mxu0
        %1124 = vmatprep.mubr.bf16.mxu0 0
        %1125 = vmatmul.mubr.bf16.gmra.mrb[0].mxu0 %v1056
        %v1126 = vpop.f32.mrb[0].mxu0
        %v1127 = vadd.f32 %v739, %v1126
        %v1128 = vpop.f32.mrb[0].mxu0
        %v1129 = vpop.f32.mrb[0].mxu0
        %v1130 = vadd.f32 %v740, %v1129
        %v1131 = vpop.f32.mrb[0].mxu0
        %1132 = vmatprep.mubr.bf16.mxu0 0
        %1133 = vmatmul.mubr.bf16.gmra.mrb[0].mxu0 %v1059
        %v1134 = vpop.f32.mrb[0].mxu0
        %v1135 = vadd.f32 %v741, %v1134
        %v1136 = vpop.f32.mrb[0].mxu0
        %v1137 = vpop.f32.mrb[0].mxu0
        %v1138 = vadd.f32 %v742, %v1137
        %v1139 = vpop.f32.mrb[0].mxu0
        %1140 = vmatprep.mubr.bf16.mxu0 0
        %1141 = vmatmul.mubr.bf16.gmra.mrb[0].mxu0 %v1062
        %v1142 = vpop.f32.mrb[0].mxu0
        %v1143 = vadd.f32 %v743, %v1142
        %v1144 = vpop.f32.mrb[0].mxu0
        %v1145 = vpop.f32.mrb[0].mxu0
        %v1146 = vadd.f32 %v744, %v1145
        %v1147 = vpop.f32.mrb[0].mxu0
        %1148 = vmatprep.mubr.bf16.mxu0 0
        %1149 = vmatmul.mubr.bf16.gmra.mrb[0].mxu0 %v1065
        %v1150 = vpop.f32.mrb[0].mxu0
        %v1151 = vadd.f32 %v745, %v1150
        %v1152 = vpop.f32.mrb[0].mxu0
        %v1153 = vpop.f32.mrb[0].mxu0
        %v1154 = vadd.f32 %v746, %v1153
        %v1155 = vpop.f32.mrb[0].mxu0
        %1156 = vmatprep.mubr.bf16.mxu0 0
        %1157 = vmatmul.mubr.bf16.gmra.mrb[0].mxu0 %v1068
        %v1158 = vpop.f32.mrb[0].mxu0
        %v1159 = vadd.f32 %v747, %v1158
        %v1160 = vpop.f32.mrb[0].mxu0
        %v1161 = vpop.f32.mrb[0].mxu0
        %v1162 = vadd.f32 %v748, %v1161
        %v1163 = vpop.f32.mrb[0].mxu0
        %1164 = vmatprep.mubr.bf16.mxu0 0
        %1165 = vmatmul.mubr.bf16.gmra.mrb[0].mxu0 %v1071
        %v1166 = vpop.f32.mrb[0].mxu0
        %v1167 = vadd.f32 %v749, %v1166
        %v1168 = vpop.f32.mrb[0].mxu0
        %v1169 = vpop.f32.mrb[0].mxu0
        %v1170 = vadd.f32 %v750, %v1169
        %v1171 = vpop.f32.mrb[0].mxu0
        %1172 = vdwg.mxu0
        %1173 = vxpose.xlu0.c.b16.start [1/8] %v675, 128
        %1174 = vxpose.xlu0.c.b16.cont [2/8] 0, 128
        %1175 = vxpose.xlu0.c.b16.cont [3/8] 0, 128
        %1176 = vxpose.xlu0.c.b16.cont [4/8] 0, 128
        %1177 = vxpose.xlu0.c.b16.cont [5/8] 0, 128
        %1178 = vxpose.xlu0.c.b16.cont [6/8] 0, 128
        %1179 = vxpose.xlu0.c.b16.cont [7/8] 0, 128
        %1180 = vxpose.xlu0.c.b16.end [8/8] 0, 128
        %v1181 = vpop.trf.xlu0
        %v1182 = vpop.trf.xlu0
        %v1183 = vpop.trf.xlu0
        %v1184 = vpop.trf.xlu0
        %v1185 = vpop.trf.xlu0
        %v1186 = vpop.trf.xlu0
        %v1187 = vpop.trf.xlu0
        %v1188 = vpop.trf.xlu0
        %v1190 = vsel %vm767, %v1181, 0
        %v1193 = vsel %vm767, %v1182, 0
        %v1196 = vsel %vm767, %v1183, 0
        %v1199 = vsel %vm767, %v1184, 0
        %v1202 = vsel %vm767, %v1185, 0
        %v1205 = vsel %vm767, %v1186, 0
        %v1208 = vsel %vm767, %v1187, 0
        %v1211 = vsel %vm767, %v1188, 0
        %v1214 = vsel %vm792, %v683, 0
        %1216 = vmatprep.subr.bf16.mxu0 0
        %1217 = vmatpush1.bf16.msra.mxu0 %v1214
        %1218 = vmatprep.subr.bf16.mxu0 0
        %1219 = vmatpush1.bf16.msra.mxu0 0
        %1220 = vmatprep.subr.bf16.mxu0 0
        %1221 = vmatpush1.bf16.msra.mxu0 0
        %1222 = vmatprep.subr.bf16.mxu0 0
        %1223 = vmatpush1.bf16.msra.mxu0 0
        %1224 = vmatprep.subr.bf16.mxu0 0
        %1225 = vmatpush1.bf16.msra.mxu0 0
        %1226 = vmatprep.subr.bf16.mxu0 0
        %1227 = vmatpush1.bf16.msra.mxu0 0
        %1228 = vmatprep.subr.bf16.mxu0 0
        %1229 = vmatpush1.bf16.msra.mxu0 0
        %1230 = vmatprep.subr.bf16.mxu0 0
        %1231 = vmatpush1.bf16.msra.mxu0 0
        %1232 = vmatprep.subr.bf16.mxu0 0
        %1233 = vmatpush1.bf16.msra.mxu0 0
        %1234 = vmatprep.subr.bf16.mxu0 0
        %1235 = vmatpush1.bf16.msra.mxu0 0
        %1236 = vmatprep.subr.bf16.mxu0 0
        %1237 = vmatpush1.bf16.msra.mxu0 0
        %1238 = vmatprep.subr.bf16.mxu0 0
        %1239 = vmatpush1.bf16.msra.mxu0 0
        %1240 = vmatprep.subr.bf16.mxu0 0
        %1241 = vmatpush1.bf16.msra.mxu0 0
        %1242 = vmatprep.subr.bf16.mxu0 0
        %1243 = vmatpush1.bf16.msra.mxu0 0
        %1244 = vmatprep.subr.bf16.mxu0 0
        %1245 = vmatpush1.bf16.msra.mxu0 0
        %1246 = vmatprep.subr.bf16.mxu0 0
        %1247 = vmatpush1.bf16.msra.mxu0 0
        %1248 = vmatprep.mubr.bf16.mxu0 0
        %1249 = vmatmul.mubr.bf16.gmra.mrb[0].mxu0 %v1190
        %v1250 = vpop.f32.mrb[0].mxu0
        %v1251 = vadd.f32 %v735, %v1250
        %v1252 = vpop.f32.mrb[0].mxu0
        %v1253 = vpop.f32.mrb[0].mxu0
        %v1254 = vadd.f32 %v736, %v1253
        %v1255 = vpop.f32.mrb[0].mxu0
        %1256 = vmatprep.mubr.bf16.mxu0 0
        %1257 = vmatmul.mubr.bf16.gmra.mrb[0].mxu0 %v1193
        %v1258 = vpop.f32.mrb[0].mxu0
        %v1259 = vadd.f32 %v737, %v1258
        %v1260 = vpop.f32.mrb[0].mxu0
        %v1261 = vpop.f32.mrb[0].mxu0
        %v1262 = vadd.f32 %v738, %v1261
        %v1263 = vpop.f32.mrb[0].mxu0
        %1264 = vmatprep.mubr.bf16.mxu0 0
        %1265 = vmatmul.mubr.bf16.gmra.mrb[0].mxu0 %v1196
        %v1266 = vpop.f32.mrb[0].mxu0
        %v1267 = vadd.f32 %v739, %v1266
        %v1268 = vpop.f32.mrb[0].mxu0
        %v1269 = vpop.f32.mrb[0].mxu0
        %v1270 = vadd.f32 %v740, %v1269
        %v1271 = vpop.f32.mrb[0].mxu0
        %1272 = vmatprep.mubr.bf16.mxu0 0
        %1273 = vmatmul.mubr.bf16.gmra.mrb[0].mxu0 %v1199
        %v1274 = vpop.f32.mrb[0].mxu0
        %v1275 = vadd.f32 %v741, %v1274
        %v1276 = vpop.f32.mrb[0].mxu0
        %v1277 = vpop.f32.mrb[0].mxu0
        %v1278 = vadd.f32 %v742, %v1277
        %v1279 = vpop.f32.mrb[0].mxu0
        %1280 = vmatprep.mubr.bf16.mxu0 0
        %1281 = vmatmul.mubr.bf16.gmra.mrb[0].mxu0 %v1202
        %v1282 = vpop.f32.mrb[0].mxu0
        %v1283 = vadd.f32 %v743, %v1282
        %v1284 = vpop.f32.mrb[0].mxu0
        %v1285 = vpop.f32.mrb[0].mxu0
        %v1286 = vadd.f32 %v744, %v1285
        %v1287 = vpop.f32.mrb[0].mxu0
        %1288 = vmatprep.mubr.bf16.mxu0 0
        %1289 = vmatmul.mubr.bf16.gmra.mrb[0].mxu0 %v1205
        %v1290 = vpop.f32.mrb[0].mxu0
        %v1291 = vadd.f32 %v745, %v1290
        %v1292 = vpop.f32.mrb[0].mxu0
        %v1293 = vpop.f32.mrb[0].mxu0
        %v1294 = vadd.f32 %v746, %v1293
        %v1295 = vpop.f32.mrb[0].mxu0
        %1296 = vmatprep.mubr.bf16.mxu0 0
        %1297 = vmatmul.mubr.bf16.gmra.mrb[0].mxu0 %v1208
        %v1298 = vpop.f32.mrb[0].mxu0
        %v1299 = vadd.f32 %v747, %v1298
        %v1300 = vpop.f32.mrb[0].mxu0
        %v1301 = vpop.f32.mrb[0].mxu0
        %v1302 = vadd.f32 %v748, %v1301
        %v1303 = vpop.f32.mrb[0].mxu0
        %1304 = vmatprep.mubr.bf16.mxu0 0
        %1305 = vmatmul.mubr.bf16.gmra.mrb[0].mxu0 %v1211
        %v1306 = vpop.f32.mrb[0].mxu0
        %v1307 = vadd.f32 %v749, %v1306
        %v1308 = vpop.f32.mrb[0].mxu0
        %v1309 = vpop.f32.mrb[0].mxu0
        %v1310 = vadd.f32 %v750, %v1309
        %v1311 = vpop.f32.mrb[0].mxu0
        %1312 = vdwg.mxu0
        %v1313 = vld [vmem:[#allocation4] sm:$0x1]
        %v1314 = vld [vmem:[#allocation4 + $0x1] sm:$0x1]
        %v1315 = vld [vmem:[#allocation4 + $0x2] sm:$0x1]
        %v1316 = vld [vmem:[#allocation4 + $0x3] sm:$0x1]
        %v1317 = vmax.f32 %v831, %v834
        %v1318 = vmax.f32 %v1317, %v839
        %v1319 = vmax.f32 %v1318, %v842
        %v1320 = vmax.f32 %v1319, %v847
        %v1321 = vmax.f32 %v1320, %v850
        %v1322 = vmax.f32 %v1321, %v855
        %v1323 = vmax.f32 %v1322, %v858
        %v1324 = vmax.f32 %v1323, %v863
        %v1325 = vmax.f32 %v1324, %v866
        %v1326 = vmax.f32 %v1325, %v871
        %v1327 = vmax.f32 %v1326, %v874
        %v1328 = vmax.f32 %v1327, %v879
        %v1329 = vmax.f32 %v1328, %v882
        %v1330 = vmax.f32 %v1329, %v887
        %v1331 = vmax.f32 %v1330, %v890
        %v1332 = vrot.slane %v1331, 4
        %v1333 = vmax.f32 %v1331, %v1332
        %v1334 = vrot.slane %v1333, 2
        %v1335 = vmax.f32 %v1333, %v1334
        %v1336 = vrot.slane %v1335, 1
        %v1337 = vmax.f32 %v1335, %v1336
        %v1338 = vmax.f32 %v971, %v974
        %v1339 = vmax.f32 %v1338, %v979
        %v1340 = vmax.f32 %v1339, %v982
        %v1341 = vmax.f32 %v1340, %v987
        %v1342 = vmax.f32 %v1341, %v990
        %v1343 = vmax.f32 %v1342, %v995
        %v1344 = vmax.f32 %v1343, %v998
        %v1345 = vmax.f32 %v1344, %v1003
        %v1346 = vmax.f32 %v1345, %v1006
        %v1347 = vmax.f32 %v1346, %v1011
        %v1348 = vmax.f32 %v1347, %v1014
        %v1349 = vmax.f32 %v1348, %v1019
        %v1350 = vmax.f32 %v1349, %v1022
        %v1351 = vmax.f32 %v1350, %v1027
        %v1352 = vmax.f32 %v1351, %v1030
        %v1353 = vrot.slane %v1352, 4
        %v1354 = vmax.f32 %v1352, %v1353
        %v1355 = vrot.slane %v1354, 2
        %v1356 = vmax.f32 %v1354, %v1355
        %v1357 = vrot.slane %v1356, 1
        %v1358 = vmax.f32 %v1356, %v1357
        %v1359 = vmax.f32 %v1111, %v1114
        %v1360 = vmax.f32 %v1359, %v1119
        %v1361 = vmax.f32 %v1360, %v1122
        %v1362 = vmax.f32 %v1361, %v1127
        %v1363 = vmax.f32 %v1362, %v1130
        %v1364 = vmax.f32 %v1363, %v1135
        %v1365 = vmax.f32 %v1364, %v1138
        %v1366 = vmax.f32 %v1365, %v1143
        %v1367 = vmax.f32 %v1366, %v1146
        %v1368 = vmax.f32 %v1367, %v1151
        %v1369 = vmax.f32 %v1368, %v1154
        %v1370 = vmax.f32 %v1369, %v1159
        %v1371 = vmax.f32 %v1370, %v1162
        %v1372 = vmax.f32 %v1371, %v1167
        %v1373 = vmax.f32 %v1372, %v1170
        %v1374 = vrot.slane %v1373, 4
        %v1375 = vmax.f32 %v1373, %v1374
        %v1376 = vrot.slane %v1375, 2
        %v1377 = vmax.f32 %v1375, %v1376
        %v1378 = vrot.slane %v1377, 1
        %v1379 = vmax.f32 %v1377, %v1378
        %v1380 = vmax.f32 %v1251, %v1254
        %v1381 = vmax.f32 %v1380, %v1259
        %v1382 = vmax.f32 %v1381, %v1262
        %v1383 = vmax.f32 %v1382, %v1267
        %v1384 = vmax.f32 %v1383, %v1270
        %v1385 = vmax.f32 %v1384, %v1275
        %v1386 = vmax.f32 %v1385, %v1278
        %v1387 = vmax.f32 %v1386, %v1283
        %v1388 = vmax.f32 %v1387, %v1286
        %v1389 = vmax.f32 %v1388, %v1291
        %v1390 = vmax.f32 %v1389, %v1294
        %v1391 = vmax.f32 %v1390, %v1299
        %v1392 = vmax.f32 %v1391, %v1302
        %v1393 = vmax.f32 %v1392, %v1307
        %v1394 = vmax.f32 %v1393, %v1310
        %v1395 = vrot.slane %v1394, 4
        %v1396 = vmax.f32 %v1394, %v1395
        %v1397 = vrot.slane %v1396, 2
        %v1398 = vmax.f32 %v1396, %v1397
        %v1399 = vrot.slane %v1398, 1
        %v1400 = vmax.f32 %v1398, %v1399
        %v1401 = vmax.f32 %v1313, %v1337
        %v1402 = vmax.f32 %v1314, %v1358
        %v1403 = vmax.f32 %v1315, %v1379
        %v1404 = vmax.f32 %v1316, %v1400
        %v1405 = vsub.f32 %v1313, %v1401
        %v1406 = vsub.f32 %v1314, %v1402
        %v1407 = vsub.f32 %v1315, %v1403
        %v1408 = vsub.f32 %v1316, %v1404
        %v1409 = vmul.f32 %v1405, 1.442695
        %v1410 = vpow.pop %v1409
        %v1411 = vmul.f32 %v1406, 1.442695
        %v1412 = vpow.pop %v1411
        %v1413 = vmul.f32 %v1407, 1.442695
        %v1414 = vpow.pop %v1413
        %v1415 = vmul.f32 %v1408, 1.442695
        %v1416 = vpow.pop %v1415
        %v1421 = vlaneseq
        %v1422 = vshrl.u32 %v1421, 7
        %v1423 = vsub.s32 0, %v1422
        %v1424 = vrot.slane %v1401, %v1423
        %v1425 = vlaneseq
        %v1426 = vshrl.u32 %v1425, 7
        %v1427 = vsub.s32 0, %v1426
        %v1428 = vrot.slane %v1402, %v1427
        %v1429 = vlaneseq
        %v1430 = vshrl.u32 %v1429, 7
        %v1431 = vsub.s32 0, %v1430
        %v1432 = vrot.slane %v1403, %v1431
        %v1433 = vlaneseq
        %v1434 = vshrl.u32 %v1433, 7
        %v1435 = vsub.s32 0, %v1434
        %v1436 = vrot.slane %v1404, %v1435
        %v1441 = vsub.f32 %v831, %v1424
        %v1442 = vsub.f32 %v834, %v1424
        %v1443 = vsub.f32 %v839, %v1424
        %v1444 = vsub.f32 %v842, %v1424
        %v1445 = vsub.f32 %v847, %v1424
        %v1446 = vsub.f32 %v850, %v1424
        %v1447 = vsub.f32 %v855, %v1424
        %v1448 = vsub.f32 %v858, %v1424
        %v1449 = vsub.f32 %v863, %v1424
        %v1450 = vsub.f32 %v866, %v1424
        %v1451 = vsub.f32 %v871, %v1424
        %v1452 = vsub.f32 %v874, %v1424
        %v1453 = vsub.f32 %v879, %v1424
        %v1454 = vsub.f32 %v882, %v1424
        %v1455 = vsub.f32 %v887, %v1424
        %v1456 = vsub.f32 %v890, %v1424
        %v1457 = vsub.f32 %v971, %v1428
        %v1458 = vsub.f32 %v974, %v1428
        %v1459 = vsub.f32 %v979, %v1428
        %v1460 = vsub.f32 %v982, %v1428
        %v1461 = vsub.f32 %v987, %v1428
        %v1462 = vsub.f32 %v990, %v1428
        %v1463 = vsub.f32 %v995, %v1428
        %v1464 = vsub.f32 %v998, %v1428
        %v1465 = vsub.f32 %v1003, %v1428
        %v1466 = vsub.f32 %v1006, %v1428
        %v1467 = vsub.f32 %v1011, %v1428
        %v1468 = vsub.f32 %v1014, %v1428
        %v1469 = vsub.f32 %v1019, %v1428
        %v1470 = vsub.f32 %v1022, %v1428
        %v1471 = vsub.f32 %v1027, %v1428
        %v1472 = vsub.f32 %v1030, %v1428
        %v1473 = vsub.f32 %v1111, %v1432
        %v1474 = vsub.f32 %v1114, %v1432
        %v1475 = vsub.f32 %v1119, %v1432
        %v1476 = vsub.f32 %v1122, %v1432
        %v1477 = vsub.f32 %v1127, %v1432
        %v1478 = vsub.f32 %v1130, %v1432
        %v1479 = vsub.f32 %v1135, %v1432
        %v1480 = vsub.f32 %v1138, %v1432
        %v1481 = vsub.f32 %v1143, %v1432
        %v1482 = vsub.f32 %v1146, %v1432
        %v1483 = vsub.f32 %v1151, %v1432
        %v1484 = vsub.f32 %v1154, %v1432
        %v1485 = vsub.f32 %v1159, %v1432
        %v1486 = vsub.f32 %v1162, %v1432
        %v1487 = vsub.f32 %v1167, %v1432
        %v1488 = vsub.f32 %v1170, %v1432
        %v1489 = vsub.f32 %v1251, %v1436
        %v1490 = vsub.f32 %v1254, %v1436
        %v1491 = vsub.f32 %v1259, %v1436
        %v1492 = vsub.f32 %v1262, %v1436
        %v1493 = vsub.f32 %v1267, %v1436
        %v1494 = vsub.f32 %v1270, %v1436
        %v1495 = vsub.f32 %v1275, %v1436
        %v1496 = vsub.f32 %v1278, %v1436
        %v1497 = vsub.f32 %v1283, %v1436
        %v1498 = vsub.f32 %v1286, %v1436
        %v1499 = vsub.f32 %v1291, %v1436
        %v1500 = vsub.f32 %v1294, %v1436
        %v1501 = vsub.f32 %v1299, %v1436
        %v1502 = vsub.f32 %v1302, %v1436
        %v1503 = vsub.f32 %v1307, %v1436
        %v1504 = vsub.f32 %v1310, %v1436
        %v1505 = vpack.c.bf16 %v1442, %v1441
        %v1506 = vpack.c.bf16 %v1444, %v1443
        %v1507 = vpack.c.bf16 %v1446, %v1445
        %v1508 = vpack.c.bf16 %v1448, %v1447
        %v1509 = vpack.c.bf16 %v1450, %v1449
        %v1510 = vpack.c.bf16 %v1452, %v1451
        %v1511 = vpack.c.bf16 %v1454, %v1453
        %v1512 = vpack.c.bf16 %v1456, %v1455
        %v1513 = vpack.c.bf16 %v1458, %v1457
        %v1514 = vpack.c.bf16 %v1460, %v1459
        %v1515 = vpack.c.bf16 %v1462, %v1461
        %v1516 = vpack.c.bf16 %v1464, %v1463
        %v1517 = vpack.c.bf16 %v1466, %v1465
        %v1518 = vpack.c.bf16 %v1468, %v1467
        %v1519 = vpack.c.bf16 %v1470, %v1469
        %v1520 = vpack.c.bf16 %v1472, %v1471
        %v1521 = vpack.c.bf16 %v1474, %v1473
        %v1522 = vpack.c.bf16 %v1476, %v1475
        %v1523 = vpack.c.bf16 %v1478, %v1477
        %v1524 = vpack.c.bf16 %v1480, %v1479
        %v1525 = vpack.c.bf16 %v1482, %v1481
        %v1526 = vpack.c.bf16 %v1484, %v1483
        %v1527 = vpack.c.bf16 %v1486, %v1485
        %v1528 = vpack.c.bf16 %v1488, %v1487
        %v1529 = vpack.c.bf16 %v1490, %v1489
        %v1530 = vpack.c.bf16 %v1492, %v1491
        %v1531 = vpack.c.bf16 %v1494, %v1493
        %v1532 = vpack.c.bf16 %v1496, %v1495
        %v1533 = vpack.c.bf16 %v1498, %v1497
        %v1534 = vpack.c.bf16 %v1500, %v1499
        %v1535 = vpack.c.bf16 %v1502, %v1501
        %v1536 = vpack.c.bf16 %v1504, %v1503
        %v1538 = vmul.bf16 %v1505, 1069105081
        %v1539 = vpow.bf16.pop %v1538
        %v1541 = vmul.bf16 %v1506, 1069105081
        %v1542 = vpow.bf16.pop %v1541
        %v1544 = vmul.bf16 %v1507, 1069105081
        %v1545 = vpow.bf16.pop %v1544
        %v1547 = vmul.bf16 %v1508, 1069105081
        %v1548 = vpow.bf16.pop %v1547
        %v1550 = vmul.bf16 %v1509, 1069105081
        %v1551 = vpow.bf16.pop %v1550
        %v1553 = vmul.bf16 %v1510, 1069105081
        %v1554 = vpow.bf16.pop %v1553
        %v1556 = vmul.bf16 %v1511, 1069105081
        %v1557 = vpow.bf16.pop %v1556
        %v1559 = vmul.bf16 %v1512, 1069105081
        %v1560 = vpow.bf16.pop %v1559
        %v1562 = vmul.bf16 %v1513, 1069105081
        %v1563 = vpow.bf16.pop %v1562
        %v1565 = vmul.bf16 %v1514, 1069105081
        %v1566 = vpow.bf16.pop %v1565
        %v1568 = vmul.bf16 %v1515, 1069105081
        %v1569 = vpow.bf16.pop %v1568
        %v1571 = vmul.bf16 %v1516, 1069105081
        %v1572 = vpow.bf16.pop %v1571
        %v1574 = vmul.bf16 %v1517, 1069105081
        %v1575 = vpow.bf16.pop %v1574
        %v1577 = vmul.bf16 %v1518, 1069105081
        %v1578 = vpow.bf16.pop %v1577
        %v1580 = vmul.bf16 %v1519, 1069105081
        %v1581 = vpow.bf16.pop %v1580
        %v1583 = vmul.bf16 %v1520, 1069105081
        %v1584 = vpow.bf16.pop %v1583
        %v1586 = vmul.bf16 %v1521, 1069105081
        %v1587 = vpow.bf16.pop %v1586
        %v1589 = vmul.bf16 %v1522, 1069105081
        %v1590 = vpow.bf16.pop %v1589
        %v1592 = vmul.bf16 %v1523, 1069105081
        %v1593 = vpow.bf16.pop %v1592
        %v1595 = vmul.bf16 %v1524, 1069105081
        %v1596 = vpow.bf16.pop %v1595
        %v1598 = vmul.bf16 %v1525, 1069105081
        %v1599 = vpow.bf16.pop %v1598
        %v1601 = vmul.bf16 %v1526, 1069105081
        %v1602 = vpow.bf16.pop %v1601
        %v1604 = vmul.bf16 %v1527, 1069105081
        %v1605 = vpow.bf16.pop %v1604
        %v1607 = vmul.bf16 %v1528, 1069105081
        %v1608 = vpow.bf16.pop %v1607
        %v1610 = vmul.bf16 %v1529, 1069105081
        %v1611 = vpow.bf16.pop %v1610
        %v1613 = vmul.bf16 %v1530, 1069105081
        %v1614 = vpow.bf16.pop %v1613
        %v1616 = vmul.bf16 %v1531, 1069105081
        %v1617 = vpow.bf16.pop %v1616
        %v1619 = vmul.bf16 %v1532, 1069105081
        %v1620 = vpow.bf16.pop %v1619
        %v1622 = vmul.bf16 %v1533, 1069105081
        %v1623 = vpow.bf16.pop %v1622
        %v1625 = vmul.bf16 %v1534, 1069105081
        %v1626 = vpow.bf16.pop %v1625
        %v1628 = vmul.bf16 %v1535, 1069105081
        %v1629 = vpow.bf16.pop %v1628
        %v1631 = vmul.bf16 %v1536, 1069105081
        %v1632 = vpow.bf16.pop %v1631
        %v1633 = vld [vmem:[#allocation5] sm:$0x1]
        %v1634 = vld [vmem:[#allocation5 + $0x1] sm:$0x1]
        %v1635 = vld [vmem:[#allocation5 + $0x2] sm:$0x1]
        %v1636 = vld [vmem:[#allocation5 + $0x3] sm:$0x1]
        %v1637 = vmul.f32 %v1410, %v1633
        %v1638 = vmul.f32 %v1412, %v1634
        %v1639 = vmul.f32 %v1414, %v1635
        %v1640 = vmul.f32 %v1416, %v1636
        %v1641 = vunpack.c.l.bf16 %v1539
        %v1642 = vunpack.c.h.bf16 %v1539
        %v1643 = vunpack.c.l.bf16 %v1542
        %v1644 = vunpack.c.h.bf16 %v1542
        %v1645 = vunpack.c.l.bf16 %v1545
        %v1646 = vunpack.c.h.bf16 %v1545
        %v1647 = vunpack.c.l.bf16 %v1548
        %v1648 = vunpack.c.h.bf16 %v1548
        %v1649 = vunpack.c.l.bf16 %v1551
        %v1650 = vunpack.c.h.bf16 %v1551
        %v1651 = vunpack.c.l.bf16 %v1554
        %v1652 = vunpack.c.h.bf16 %v1554
        %v1653 = vunpack.c.l.bf16 %v1557
        %v1654 = vunpack.c.h.bf16 %v1557
        %v1655 = vunpack.c.l.bf16 %v1560
        %v1656 = vunpack.c.h.bf16 %v1560
        %v1657 = vunpack.c.l.bf16 %v1563
        %v1658 = vunpack.c.h.bf16 %v1563
        %v1659 = vunpack.c.l.bf16 %v1566
        %v1660 = vunpack.c.h.bf16 %v1566
        %v1661 = vunpack.c.l.bf16 %v1569
        %v1662 = vunpack.c.h.bf16 %v1569
        %v1663 = vunpack.c.l.bf16 %v1572
        %v1664 = vunpack.c.h.bf16 %v1572
        %v1665 = vunpack.c.l.bf16 %v1575
        %v1666 = vunpack.c.h.bf16 %v1575
        %v1667 = vunpack.c.l.bf16 %v1578
        %v1668 = vunpack.c.h.bf16 %v1578
        %v1669 = vunpack.c.l.bf16 %v1581
        %v1670 = vunpack.c.h.bf16 %v1581
        %v1671 = vunpack.c.l.bf16 %v1584
        %v1672 = vunpack.c.h.bf16 %v1584
        %v1673 = vunpack.c.l.bf16 %v1587
        %v1674 = vunpack.c.h.bf16 %v1587
        %v1675 = vunpack.c.l.bf16 %v1590
        %v1676 = vunpack.c.h.bf16 %v1590
        %v1677 = vunpack.c.l.bf16 %v1593
        %v1678 = vunpack.c.h.bf16 %v1593
        %v1679 = vunpack.c.l.bf16 %v1596
        %v1680 = vunpack.c.h.bf16 %v1596
        %v1681 = vunpack.c.l.bf16 %v1599
        %v1682 = vunpack.c.h.bf16 %v1599
        %v1683 = vunpack.c.l.bf16 %v1602
        %v1684 = vunpack.c.h.bf16 %v1602
        %v1685 = vunpack.c.l.bf16 %v1605
        %v1686 = vunpack.c.h.bf16 %v1605
        %v1687 = vunpack.c.l.bf16 %v1608
        %v1688 = vunpack.c.h.bf16 %v1608
        %v1689 = vunpack.c.l.bf16 %v1611
        %v1690 = vunpack.c.h.bf16 %v1611
        %v1691 = vunpack.c.l.bf16 %v1614
        %v1692 = vunpack.c.h.bf16 %v1614
        %v1693 = vunpack.c.l.bf16 %v1617
        %v1694 = vunpack.c.h.bf16 %v1617
        %v1695 = vunpack.c.l.bf16 %v1620
        %v1696 = vunpack.c.h.bf16 %v1620
        %v1697 = vunpack.c.l.bf16 %v1623
        %v1698 = vunpack.c.h.bf16 %v1623
        %v1699 = vunpack.c.l.bf16 %v1626
        %v1700 = vunpack.c.h.bf16 %v1626
        %v1701 = vunpack.c.l.bf16 %v1629
        %v1702 = vunpack.c.h.bf16 %v1629
        %v1703 = vunpack.c.l.bf16 %v1632
        %v1704 = vunpack.c.h.bf16 %v1632
        %v1705 = vadd.f32 %v1641, %v1642
        %v1706 = vadd.f32 %v1705, %v1643
        %v1707 = vadd.f32 %v1706, %v1644
        %v1708 = vadd.f32 %v1707, %v1645
        %v1709 = vadd.f32 %v1708, %v1646
        %v1710 = vadd.f32 %v1709, %v1647
        %v1711 = vadd.f32 %v1710, %v1648
        %v1712 = vadd.f32 %v1711, %v1649
        %v1713 = vadd.f32 %v1712, %v1650
        %v1714 = vadd.f32 %v1713, %v1651
        %v1715 = vadd.f32 %v1714, %v1652
        %v1716 = vadd.f32 %v1715, %v1653
        %v1717 = vadd.f32 %v1716, %v1654
        %v1718 = vadd.f32 %v1717, %v1655
        %v1719 = vadd.f32 %v1718, %v1656
        %v1720 = vrot.slane %v1719, 4
        %v1721 = vadd.f32 %v1719, %v1720
        %v1722 = vrot.slane %v1721, 2
        %v1723 = vadd.f32 %v1721, %v1722
        %v1724 = vrot.slane %v1723, 1
        %v1725 = vadd.f32 %v1723, %v1724
        %v1726 = vadd.f32 %v1657, %v1658
        %v1727 = vadd.f32 %v1726, %v1659
        %v1728 = vadd.f32 %v1727, %v1660
        %v1729 = vadd.f32 %v1728, %v1661
        %v1730 = vadd.f32 %v1729, %v1662
        %v1731 = vadd.f32 %v1730, %v1663
        %v1732 = vadd.f32 %v1731, %v1664
        %v1733 = vadd.f32 %v1732, %v1665
        %v1734 = vadd.f32 %v1733, %v1666
        %v1735 = vadd.f32 %v1734, %v1667
        %v1736 = vadd.f32 %v1735, %v1668
        %v1737 = vadd.f32 %v1736, %v1669
        %v1738 = vadd.f32 %v1737, %v1670
        %v1739 = vadd.f32 %v1738, %v1671
        %v1740 = vadd.f32 %v1739, %v1672
        %v1741 = vrot.slane %v1740, 4
        %v1742 = vadd.f32 %v1740, %v1741
        %v1743 = vrot.slane %v1742, 2
        %v1744 = vadd.f32 %v1742, %v1743
        %v1745 = vrot.slane %v1744, 1
        %v1746 = vadd.f32 %v1744, %v1745
        %v1747 = vadd.f32 %v1673, %v1674
        %v1748 = vadd.f32 %v1747, %v1675
        %v1749 = vadd.f32 %v1748, %v1676
        %v1750 = vadd.f32 %v1749, %v1677
        %v1751 = vadd.f32 %v1750, %v1678
        %v1752 = vadd.f32 %v1751, %v1679
        %v1753 = vadd.f32 %v1752, %v1680
        %v1754 = vadd.f32 %v1753, %v1681
        %v1755 = vadd.f32 %v1754, %v1682
        %v1756 = vadd.f32 %v1755, %v1683
        %v1757 = vadd.f32 %v1756, %v1684
        %v1758 = vadd.f32 %v1757, %v1685
        %v1759 = vadd.f32 %v1758, %v1686
        %v1760 = vadd.f32 %v1759, %v1687
        %v1761 = vadd.f32 %v1760, %v1688
        %v1762 = vrot.slane %v1761, 4
        %v1763 = vadd.f32 %v1761, %v1762
        %v1764 = vrot.slane %v1763, 2
        %v1765 = vadd.f32 %v1763, %v1764
        %v1766 = vrot.slane %v1765, 1
        %v1767 = vadd.f32 %v1765, %v1766
        %v1768 = vadd.f32 %v1689, %v1690
        %v1769 = vadd.f32 %v1768, %v1691
        %v1770 = vadd.f32 %v1769, %v1692
        %v1771 = vadd.f32 %v1770, %v1693
        %v1772 = vadd.f32 %v1771, %v1694
        %v1773 = vadd.f32 %v1772, %v1695
        %v1774 = vadd.f32 %v1773, %v1696
        %v1775 = vadd.f32 %v1774, %v1697
        %v1776 = vadd.f32 %v1775, %v1698
        %v1777 = vadd.f32 %v1776, %v1699
        %v1778 = vadd.f32 %v1777, %v1700
        %v1779 = vadd.f32 %v1778, %v1701
        %v1780 = vadd.f32 %v1779, %v1702
        %v1781 = vadd.f32 %v1780, %v1703
        %v1782 = vadd.f32 %v1781, %v1704
        %v1783 = vrot.slane %v1782, 4
        %v1784 = vadd.f32 %v1782, %v1783
        %v1785 = vrot.slane %v1784, 2
        %v1786 = vadd.f32 %v1784, %v1785
        %v1787 = vrot.slane %v1786, 1
        %v1788 = vadd.f32 %v1786, %v1787
        %v1789 = vadd.f32 %v1637, %v1725
        %v1790 = vadd.f32 %v1638, %v1746
        %v1791 = vadd.f32 %v1639, %v1767
        %v1792 = vadd.f32 %v1640, %v1788
        %1793 = vst [vmem:[#allocation5] sm:$0x1] %v1789
        %1794 = vst [vmem:[#allocation5 + $0x1] sm:$0x1] %v1790
        %1795 = vst [vmem:[#allocation5 + $0x2] sm:$0x1] %v1791
        %1796 = vst [vmem:[#allocation5 + $0x3] sm:$0x1] %v1792
        %1797 = vmatprep.subr.bf16.mxu0 0
        %1798 = vmatpush1.bf16.msra.mxu0 %v1539
        %1799 = vmatprep.subr.bf16.mxu0 0
        %1800 = vmatpush1.bf16.msra.mxu0 %v1542
        %1801 = vmatprep.subr.bf16.mxu0 0
        %1802 = vmatpush1.bf16.msra.mxu0 %v1545
        %1803 = vmatprep.subr.bf16.mxu0 0
        %1804 = vmatpush1.bf16.msra.mxu0 %v1548
        %1805 = vmatprep.subr.bf16.mxu0 0
        %1806 = vmatpush1.bf16.msra.mxu0 %v1551
        %1807 = vmatprep.subr.bf16.mxu0 0
        %1808 = vmatpush1.bf16.msra.mxu0 %v1554
        %1809 = vmatprep.subr.bf16.mxu0 0
        %1810 = vmatpush1.bf16.msra.mxu0 %v1557
        %1811 = vmatprep.subr.bf16.mxu0 0
        %1812 = vmatpush1.bf16.msra.mxu0 %v1560
        %1813 = vmatprep.subr.bf16.mxu0 0
        %1814 = vmatpush1.bf16.msra.mxu0 0
        %1815 = vmatprep.subr.bf16.mxu0 0
        %1816 = vmatpush1.bf16.msra.mxu0 0
        %1817 = vmatprep.subr.bf16.mxu0 0
        %1818 = vmatpush1.bf16.msra.mxu0 0
        %1819 = vmatprep.subr.bf16.mxu0 0
        %1820 = vmatpush1.bf16.msra.mxu0 0
        %1821 = vmatprep.subr.bf16.mxu0 0
        %1822 = vmatpush1.bf16.msra.mxu0 0
        %1823 = vmatprep.subr.bf16.mxu0 0
        %1824 = vmatpush1.bf16.msra.mxu0 0
        %1825 = vmatprep.subr.bf16.mxu0 0
        %1826 = vmatpush1.bf16.msra.mxu0 0
        %1827 = vmatprep.subr.bf16.mxu0 0
        %1828 = vmatpush1.bf16.msra.mxu0 0
        %1829 = vmatprep.mubr.bf16.mxu0 0
        %1830 = vmatmul.mubr.bf16.gmra.mrb[0].mxu0 %v676
        %v1831 = vpop.f32.mrb[0].mxu0
        %v1832 = vadd.f32 0.0, %v1831
        %v1833 = vpop.f32.mrb[0].mxu0
        %v1834 = vpop.f32.mrb[0].mxu0
        %v1835 = vpop.f32.mrb[0].mxu0
        %1836 = vdwg.mxu0
        %1837 = vmatprep.subr.bf16.mxu0 0
        %1838 = vmatpush1.bf16.msra.mxu0 %v1563
        %1839 = vmatprep.subr.bf16.mxu0 0
        %1840 = vmatpush1.bf16.msra.mxu0 %v1566
        %1841 = vmatprep.subr.bf16.mxu0 0
        %1842 = vmatpush1.bf16.msra.mxu0 %v1569
        %1843 = vmatprep.subr.bf16.mxu0 0
        %1844 = vmatpush1.bf16.msra.mxu0 %v1572
        %1845 = vmatprep.subr.bf16.mxu0 0
        %1846 = vmatpush1.bf16.msra.mxu0 %v1575
        %1847 = vmatprep.subr.bf16.mxu0 0
        %1848 = vmatpush1.bf16.msra.mxu0 %v1578
        %1849 = vmatprep.subr.bf16.mxu0 0
        %1850 = vmatpush1.bf16.msra.mxu0 %v1581
        %1851 = vmatprep.subr.bf16.mxu0 0
        %1852 = vmatpush1.bf16.msra.mxu0 %v1584
        %1853 = vmatprep.subr.bf16.mxu0 0
        %1854 = vmatpush1.bf16.msra.mxu0 0
        %1855 = vmatprep.subr.bf16.mxu0 0
        %1856 = vmatpush1.bf16.msra.mxu0 0
        %1857 = vmatprep.subr.bf16.mxu0 0
        %1858 = vmatpush1.bf16.msra.mxu0 0
        %1859 = vmatprep.subr.bf16.mxu0 0
        %1860 = vmatpush1.bf16.msra.mxu0 0
        %1861 = vmatprep.subr.bf16.mxu0 0
        %1862 = vmatpush1.bf16.msra.mxu0 0
        %1863 = vmatprep.subr.bf16.mxu0 0
        %1864 = vmatpush1.bf16.msra.mxu0 0
        %1865 = vmatprep.subr.bf16.mxu0 0
        %1866 = vmatpush1.bf16.msra.mxu0 0
        %1867 = vmatprep.subr.bf16.mxu0 0
        %1868 = vmatpush1.bf16.msra.mxu0 0
        %1869 = vmatprep.mubr.bf16.mxu0 0
        %1870 = vmatmul.mubr.bf16.gmra.mrb[0].mxu0 %v677
        %v1871 = vpop.f32.mrb[0].mxu0
        %v1872 = vadd.f32 0.0, %v1871
        %v1873 = vpop.f32.mrb[0].mxu0
        %v1874 = vpop.f32.mrb[0].mxu0
        %v1875 = vpop.f32.mrb[0].mxu0
        %1876 = vdwg.mxu0
        %1877 = vmatprep.subr.bf16.mxu0 0
        %1878 = vmatpush1.bf16.msra.mxu0 %v1587
        %1879 = vmatprep.subr.bf16.mxu0 0
        %1880 = vmatpush1.bf16.msra.mxu0 %v1590
        %1881 = vmatprep.subr.bf16.mxu0 0
        %1882 = vmatpush1.bf16.msra.mxu0 %v1593
        %1883 = vmatprep.subr.bf16.mxu0 0
        %1884 = vmatpush1.bf16.msra.mxu0 %v1596
        %1885 = vmatprep.subr.bf16.mxu0 0
        %1886 = vmatpush1.bf16.msra.mxu0 %v1599
        %1887 = vmatprep.subr.bf16.mxu0 0
        %1888 = vmatpush1.bf16.msra.mxu0 %v1602
        %1889 = vmatprep.subr.bf16.mxu0 0
        %1890 = vmatpush1.bf16.msra.mxu0 %v1605
        %1891 = vmatprep.subr.bf16.mxu0 0
        %1892 = vmatpush1.bf16.msra.mxu0 %v1608
        %1893 = vmatprep.subr.bf16.mxu0 0
        %1894 = vmatpush1.bf16.msra.mxu0 0
        %1895 = vmatprep.subr.bf16.mxu0 0
        %1896 = vmatpush1.bf16.msra.mxu0 0
        %1897 = vmatprep.subr.bf16.mxu0 0
        %1898 = vmatpush1.bf16.msra.mxu0 0
        %1899 = vmatprep.subr.bf16.mxu0 0
        %1900 = vmatpush1.bf16.msra.mxu0 0
        %1901 = vmatprep.subr.bf16.mxu0 0
        %1902 = vmatpush1.bf16.msra.mxu0 0
        %1903 = vmatprep.subr.bf16.mxu0 0
        %1904 = vmatpush1.bf16.msra.mxu0 0
        %1905 = vmatprep.subr.bf16.mxu0 0
        %1906 = vmatpush1.bf16.msra.mxu0 0
        %1907 = vmatprep.subr.bf16.mxu0 0
        %1908 = vmatpush1.bf16.msra.mxu0 0
        %1909 = vmatprep.mubr.bf16.mxu0 0
        %1910 = vmatmul.mubr.bf16.gmra.mrb[0].mxu0 %v678
        %v1911 = vpop.f32.mrb[0].mxu0
        %v1912 = vadd.f32 0.0, %v1911
        %v1913 = vpop.f32.mrb[0].mxu0
        %v1914 = vpop.f32.mrb[0].mxu0
        %v1915 = vpop.f32.mrb[0].mxu0
        %1916 = vdwg.mxu0
        %1917 = vmatprep.subr.bf16.mxu0 0
        %1918 = vmatpush1.bf16.msra.mxu0 %v1611
        %1919 = vmatprep.subr.bf16.mxu0 0
        %1920 = vmatpush1.bf16.msra.mxu0 %v1614
        %1921 = vmatprep.subr.bf16.mxu0 0
        %1922 = vmatpush1.bf16.msra.mxu0 %v1617
        %1923 = vmatprep.subr.bf16.mxu0 0
        %1924 = vmatpush1.bf16.msra.mxu0 %v1620
        %1925 = vmatprep.subr.bf16.mxu0 0
        %1926 = vmatpush1.bf16.msra.mxu0 %v1623
        %1927 = vmatprep.subr.bf16.mxu0 0
        %1928 = vmatpush1.bf16.msra.mxu0 %v1626
        %1929 = vmatprep.subr.bf16.mxu0 0
        %1930 = vmatpush1.bf16.msra.mxu0 %v1629
        %1931 = vmatprep.subr.bf16.mxu0 0
        %1932 = vmatpush1.bf16.msra.mxu0 %v1632
        %1933 = vmatprep.subr.bf16.mxu0 0
        %1934 = vmatpush1.bf16.msra.mxu0 0
        %1935 = vmatprep.subr.bf16.mxu0 0
        %1936 = vmatpush1.bf16.msra.mxu0 0
        %1937 = vmatprep.subr.bf16.mxu0 0
        %1938 = vmatpush1.bf16.msra.mxu0 0
        %1939 = vmatprep.subr.bf16.mxu0 0
        %1940 = vmatpush1.bf16.msra.mxu0 0
        %1941 = vmatprep.subr.bf16.mxu0 0
        %1942 = vmatpush1.bf16.msra.mxu0 0
        %1943 = vmatprep.subr.bf16.mxu0 0
        %1944 = vmatpush1.bf16.msra.mxu0 0
        %1945 = vmatprep.subr.bf16.mxu0 0
        %1946 = vmatpush1.bf16.msra.mxu0 0
        %1947 = vmatprep.subr.bf16.mxu0 0
        %1948 = vmatpush1.bf16.msra.mxu0 0
        %1949 = vmatprep.mubr.bf16.mxu0 0
        %1950 = vmatmul.mubr.bf16.gmra.mrb[0].mxu0 %v679
        %v1951 = vpop.f32.mrb[0].mxu0
        %v1952 = vadd.f32 0.0, %v1951
        %v1953 = vpop.f32.mrb[0].mxu0
        %v1954 = vpop.f32.mrb[0].mxu0
        %v1955 = vpop.f32.mrb[0].mxu0
        %1956 = vdwg.mxu0
        %v1957 = vld [vmem:[#allocation3] sm:$0xff]
        %v1958 = vld [vmem:[#allocation3 + $0x8] sm:$0xff]
        %v1959 = vld [vmem:[#allocation3 + $0x10] sm:$0xff]
        %v1960 = vld [vmem:[#allocation3 + $0x18] sm:$0xff]
        %v1965 = vlaneseq
        %v1966 = vshrl.u32 %v1965, 7
        %v1967 = vsub.s32 0, %v1966
        %v1968 = vrot.slane %v1410, %v1967
        %v1969 = vlaneseq
        %v1970 = vshrl.u32 %v1969, 7
        %v1971 = vsub.s32 0, %v1970
        %v1972 = vrot.slane %v1412, %v1971
        %v1973 = vlaneseq
        %v1974 = vshrl.u32 %v1973, 7
        %v1975 = vsub.s32 0, %v1974
        %v1976 = vrot.slane %v1414, %v1975
        %v1977 = vlaneseq
        %v1978 = vshrl.u32 %v1977, 7
        %v1979 = vsub.s32 0, %v1978
        %v1980 = vrot.slane %v1416, %v1979
        %v1985 = vmul.f32 %v1968, %v1957
        %v1986 = vmul.f32 %v1972, %v1958
        %v1987 = vmul.f32 %v1976, %v1959
        %v1988 = vmul.f32 %v1980, %v1960
        %v1989 = vadd.f32 %v1985, %v1832
        %v1990 = vadd.f32 %v1986, %v1872
        %v1991 = vadd.f32 %v1987, %v1912
        %v1992 = vadd.f32 %v1988, %v1952
        %1993 = vst [vmem:[#allocation3] sm:$0xff] %v1989
        %1994 = vst [vmem:[#allocation3 + $0x8] sm:$0xff] %v1990
        %1995 = vst [vmem:[#allocation3 + $0x10] sm:$0xff] %v1991
        %1996 = vst [vmem:[#allocation3 + $0x18] sm:$0xff] %v1992
        %1997 = vst [vmem:[#allocation4] sm:$0x1] %v1401
        %1998 = vst [vmem:[#allocation4 + $0x1] sm:$0x1] %v1402
        %1999 = vst [vmem:[#allocation4 + $0x2] sm:$0x1] %v1403
        %2000 = vst [vmem:[#allocation4 + $0x3] sm:$0x1] %v1404
        // Predicated region
        $region57: #{tpu_custom_call.1} parent=51 // pred_check
          %p2001 = pneg %p368
        $region58: #{tpu_custom_call.1} parent=51 // pred_check_branch
          %2003 = sbr.rel (%p2001) target = $region60
        $region59: #{tpu_custom_call.1} parent=51 // pred_region
          %v2004 = vld [vmem:[#allocation5] sm:$0x1]
          %v2005 = vld [vmem:[#allocation5 + $0x1] sm:$0x1]
          %v2006 = vld [vmem:[#allocation5 + $0x2] sm:$0x1]
          %v2007 = vld [vmem:[#allocation5 + $0x3] sm:$0x1]
          %v2008 = vrcp.pop %v2004
          %v2009 = vrcp.pop %v2005
          %v2010 = vrcp.pop %v2006
          %v2011 = vrcp.pop %v2007
          %v2012 = vld [vmem:[#allocation3] sm:$0xff]
          %v2013 = vld [vmem:[#allocation3 + $0x8] sm:$0xff]
          %v2014 = vld [vmem:[#allocation3 + $0x10] sm:$0xff]
          %v2015 = vld [vmem:[#allocation3 + $0x18] sm:$0xff]
          %v2020 = vlaneseq
          %v2021 = vshrl.u32 %v2020, 7
          %v2022 = vsub.s32 0, %v2021
          %v2023 = vrot.slane %v2008, %v2022
          %v2024 = vlaneseq
          %v2025 = vshrl.u32 %v2024, 7
          %v2026 = vsub.s32 0, %v2025
          %v2027 = vrot.slane %v2009, %v2026
          %v2028 = vlaneseq
          %v2029 = vshrl.u32 %v2028, 7
          %v2030 = vsub.s32 0, %v2029
          %v2031 = vrot.slane %v2010, %v2030
          %v2032 = vlaneseq
          %v2033 = vshrl.u32 %v2032, 7
          %v2034 = vsub.s32 0, %v2033
          %v2035 = vrot.slane %v2011, %v2034
          %v2040 = vmul.f32 %v2012, %v2023
          %v2041 = vmul.f32 %v2013, %v2027
          %v2042 = vmul.f32 %v2014, %v2031
          %v2043 = vmul.f32 %v2015, %v2035
          %v2044 = vld [vmem:[%s6] sm:$0xf]
          %v2045 = vld [vmem:[%s6 + $0x4] sm:$0xf]
          %v2046 = vld [vmem:[%s6 + $0x8] sm:$0xf]
          %v2047 = vld [vmem:[%s6 + $0xc] sm:$0xf]
          %v2048 = vpack.c.bf16 %v2041, %v2040
          %v2049 = vpack.c.bf16 %v2043, %v2042
          %v2050 = vld [vmem:[%s7] sm:$0xff]
          %v2051 = vld [vmem:[%s7 + $0x8] sm:$0xff]
          %v2052 = vld [vmem:[%s7 + $0x10] sm:$0xff]
          %v2053 = vld [vmem:[%s7 + $0x18] sm:$0xff]
          %2055 = vset.pattern.permute.xlu0 0
          %2056 = vperm.xlu0 %2055, %v2050
          %v2057 = vpop.permute.xlu0 %2056
          %2060 = vset.pattern.permute.xlu0 0
          %2061 = vperm.xlu0 %2060, %v2051
          %v2062 = vpop.permute.xlu0 %2061
          %2065 = vset.pattern.permute.xlu0 0
          %2066 = vperm.xlu0 %2065, %v2052
          %v2067 = vpop.permute.xlu0 %2066
          %2070 = vset.pattern.permute.xlu0 0
          %2071 = vperm.xlu0 %2070, %v2053
          %v2072 = vpop.permute.xlu0 %2071
          %v2078 = vunpack.c.l.b16 %v2044
          %v2079 = vunpack.c.l.b16 %v2045
          %v2080 = vunpack.c.l.b16 %v2046
          %v2081 = vunpack.c.l.b16 %v2047
          %v2082 = vpack.c.b16 %v2079, %v2078
          %v2083 = vpack.c.b16 %v2081, %v2080
          %v2085 = vsel %vm594, %v2082, 0
          %v2088 = vsel %vm594, %v2083, 0
          %2090 = vmatprep.subr.bf16.mxu0 0
          %2091 = vmatpush1.bf16.msra.mxu0 %v2048
          %2092 = vmatprep.subr.bf16.mxu0 0
          %2093 = vmatpush1.bf16.msra.mxu0 %v2049
          %2094 = vmatprep.subr.bf16.mxu0 0
          %2095 = vmatpush1.bf16.msra.mxu0 0
          %2096 = vmatprep.subr.bf16.mxu0 0
          %2097 = vmatpush1.bf16.msra.mxu0 0
          %2098 = vmatprep.subr.bf16.mxu0 0
          %2099 = vmatpush1.bf16.msra.mxu0 0
          %2100 = vmatprep.subr.bf16.mxu0 0
          %2101 = vmatpush1.bf16.msra.mxu0 0
          %2102 = vmatprep.subr.bf16.mxu0 0
          %2103 = vmatpush1.bf16.msra.mxu0 0
          %2104 = vmatprep.subr.bf16.mxu0 0
          %2105 = vmatpush1.bf16.msra.mxu0 0
          %2106 = vmatprep.subr.bf16.mxu0 0
          %2107 = vmatpush1.bf16.msra.mxu0 0
          %2108 = vmatprep.subr.bf16.mxu0 0
          %2109 = vmatpush1.bf16.msra.mxu0 0
          %2110 = vmatprep.subr.bf16.mxu0 0
          %2111 = vmatpush1.bf16.msra.mxu0 0
          %2112 = vmatprep.subr.bf16.mxu0 0
          %2113 = vmatpush1.bf16.msra.mxu0 0
          %2114 = vmatprep.subr.bf16.mxu0 0
          %2115 = vmatpush1.bf16.msra.mxu0 0
          %2116 = vmatprep.subr.bf16.mxu0 0
          %2117 = vmatpush1.bf16.msra.mxu0 0
          %2118 = vmatprep.subr.bf16.mxu0 0
          %2119 = vmatpush1.bf16.msra.mxu0 0
          %2120 = vmatprep.subr.bf16.mxu0 0
          %2121 = vmatpush1.bf16.msra.mxu0 0
          %2122 = vmatprep.mubr.bf16.mxu0 0
          %2123 = vmatmul.mubr.bf16.gmra.mrb[0].mxu0 %v2085
          %v2124 = vpop.f32.mrb[0].mxu0
          %v2125 = vadd.f32 %v2057, %v2124
          %v2126 = vpop.f32.mrb[0].mxu0
          %v2127 = vpop.f32.mrb[0].mxu0
          %v2128 = vadd.f32 %v2062, %v2127
          %v2129 = vpop.f32.mrb[0].mxu0
          %2130 = vmatprep.mubr.bf16.mxu0 0
          %2131 = vmatmul.mubr.bf16.gmra.mrb[0].mxu0 %v2088
          %v2132 = vpop.f32.mrb[0].mxu0
          %v2133 = vadd.f32 %v2067, %v2132
          %v2134 = vpop.f32.mrb[0].mxu0
          %v2135 = vpop.f32.mrb[0].mxu0
          %v2136 = vadd.f32 %v2072, %v2135
          %v2137 = vpop.f32.mrb[0].mxu0
          %2138 = vdwg.mxu0
          %2139 = vst [vmem:[%s350] sm:$0xff] %v2125
          %2140 = vst [vmem:[%s350 + $0x8] sm:$0xff] %v2128
          %2141 = vst [vmem:[%s350 + $0x10] sm:$0xff] %v2133
          %2142 = vst [vmem:[%s350 + $0x18] sm:$0xff] %v2136
        $region60: #{tpu_custom_call.1} parent=51 // pred_fallthru
          _
        %s2143 = sand.u32 %s233, 1
        %s2144 = scalar_lea.sflag [#allocation7], %s2143
        %s2145 = sand.u32 %s233, 1
        %s2146 = smul.addr %s2145, 32
        %s2147 = scalar_lea.vmem [#allocation6], %s2146
        // Predicated region
        $region61: #{tpu_custom_call.1} parent=51 // pred_check
          %p2148 = pneg %p243
        $region62: #{tpu_custom_call.1} parent=51 // pred_check_branch
          %2150 = sbr.rel (%p2148) target = $region64
        $region63: #{tpu_custom_call.1} parent=51 // pred_region
          %s2152 = ssub.s32 512, 512
          %2153 = vsyncadd %s2144, %s2152
          %s2154 = smul.addr %s27, 4
          %s2155 = sadd.s32 %s28, %s2154
          %s2156 = smul.addr %s2155, 128
          %s2157 = scalar_lea.hbm %s8, %s2156
          %s2158 = sshll.u32 %s2147, 4
          %s2159 = int_to_ptr.vmem [resolvable:$true] %s2158
          %2164 = dma.vmem_to_hbm [thread:$0]  %s2159, 512, %s2157, %s2144, 128, 128, 8
        $region64: #{tpu_custom_call.1} parent=51 // pred_fallthru
          _
      $region52: #{tpu_custom_call.1} parent=5 // pred_fallthru
        _
      %p2165 = scmp.le.s32.totalorder 2, %s17
      // Predicated region
      $region65: #{tpu_custom_call.1} parent=5 // pred_check
        %p2166 = pneg %p2165
      $region66: #{tpu_custom_call.1} parent=5 // pred_check_branch
        %2168 = sbr.rel (%p2166) target = $region68
      $region67: #{tpu_custom_call.1} parent=5 // pred_region
        %s2169 = ssub.s32 %s17, 2
        // Predicated region
        $region69: #{tpu_custom_call.1} parent=67 // pred_check
          %p2170 = pneg %p249
        $region70: #{tpu_custom_call.1} parent=67 // pred_check_branch
          %2172 = sbr.rel (%p2170) target = $region72
        $region71: #{tpu_custom_call.1} parent=67 // pred_region
          %s2173 = sand.u32 %s234, 1
          %s2174 = scalar_lea.sflag [#allocation7], %s2173
          %s2175 = sand.u32 %s234, 1
          %s2176 = smul.addr %s2175, 32
          %s2177 = scalar_lea.vmem [#allocation6], %s2176
          %2178 = dma.done %s2174, 512
        $region72: #{tpu_custom_call.1} parent=67 // pred_fallthru
          _
      $region68: #{tpu_custom_call.1} parent=5 // pred_fallthru
        _
    $region6: #{tpu_custom_call.1} parent=1 // loop_footer
      %s21 = sadd.s32 1, %s17
    $region7: #{tpu_custom_call.1} parent=1 // loop_footer_branch
      %16 = sbr.rel target = $region3
    $region8: #{tpu_custom_call.1} parent=1 // loop_exit
      _
    %2179 = vsyncpa [#allocation7], 1
    %s2180 = scalar_lea.sflag [#allocation7], 1
    %2181 = vsyncpa %s2180, 1

</llo_original>
